<compile_context>
chip_gen: v7x
topology: tpu7x:2x2x1
jax: 0.10.0
libtpu: 0.0.40
codegen_flags: <defaults>
</compile_context>

<pallas_src>
import functools

import jax
import jax.numpy as jnp
from jax import lax
from jax.experimental import pallas as pl
from jax.experimental.pallas import tpu as pltpu


def _round_up(x, m):
    return ((x + m - 1) // m) * m


def rnn_driver_kernel(x3_ref, hc0_ref, w_ref, out_ref, *,
                      seq_len, batch, latent_dim, hidden_size,
                      row_whh, row_b, row_wout, row_bout):
    """Whole sequence in one invocation.

    x3_ref : (3, T*BP, D)   stacked [mu, log_var, eps], time-major, batch-padded.
    hc0_ref: (2, BP, H)     stacked [h0, c0].
    w_ref  : (R, 4H)        packed [W_ih^T; W_hh^T; b; W_out^T(lane-pad); b_out],
                            gate columns pre-permuted to [i, f, o, g].
    out_ref: (T*BP+BP, 4H)  rows 0:T*BP  -> tanh head output (real lanes 0:n_out),
                            rows T*BP:   -> [h_N | c_N] in lanes [0:H | H:2H].
    """
    T, BP, D, H = seq_len, batch, latent_dim, hidden_size
    TH = 3 * H  # sigmoid gates span [i | f | o]

    # --- batched reparameterize for ALL timesteps (single VPU/EUP pass) ---
    z = x3_ref[2] * jnp.exp(0.5 * x3_ref[1]) + x3_ref[0]                   # (T*BP, D)

    # --- packed parameter slab: static, sublane-aligned slices ---
    w_ih = w_ref[0:D, :]                                                   # (D, 4H)
    w_hh = w_ref[row_whh:row_whh + H, :]                                   # (H, 4H)
    b = w_ref[row_b:row_b + 1, :]                                          # (1, 4H)
    w_out = w_ref[row_wout:row_wout + H, :]                                # (H, 4H) lane-padded
    b_out = w_ref[row_bout:row_bout + 1, :]                                # (1, 4H) lane-padded

    # --- hoisted input projection: one (T*BP, D) @ (D, 4H) matmul (MXU) ---
    gx = jnp.dot(z, w_ih, preferred_element_type=jnp.float32) + b          # (T*BP, 4H)

    # --- serial LSTM recurrence, fully unrolled; h/c and the h_t stack in vregs ---
    h = hc0_ref[0]                                                         # (BP, H)
    c = hc0_ref[1]                                                         # (BP, H)
    hs = []
    for t in range(T):
        gates = gx[t * BP:(t + 1) * BP, :] + jnp.dot(
            h, w_hh, preferred_element_type=jnp.float32)                   # (BP, 4H)
        s = jax.nn.sigmoid(gates[:, 0:TH])   # [i | f | o]  (one EUP pass)
        g = jnp.tanh(gates[:, TH:])          # g            (one EUP pass)
        i_g = s[:, 0:H]
        f_g = s[:, H:2 * H]
        o_g = s[:, 2 * H:TH]
        c = f_g * c + i_g * g
        h = o_g * jnp.tanh(c)
        hs.append(h)

    # --- batched output head: one (T*BP, H) @ (H, 4H) matmul, lane-dense store ---
    hs_all = jnp.concatenate(hs, axis=0)                                   # (T*BP, H)
    out_ref[0:T * BP, :] = jnp.tanh(
        jnp.dot(hs_all, w_out, preferred_element_type=jnp.float32) + b_out)
    out_ref[T * BP:T * BP + BP, 0:H] = h
    out_ref[T * BP:T * BP + BP, H:2 * H] = c


def _permute_gate_columns(w):
    """PyTorch LSTM gate order [i, f, g, o] -> kernel order [i, f, o, g]."""
    i, f, g, o = jnp.split(w, 4, axis=-1)
    return jnp.concatenate([i, f, o, g], axis=-1)


def _pack_params(params):
    """Pack all weights/biases into one (rows, 4H) f32 slab (single input DMA)."""
    D, FH = params["w_ih"].shape
    H = params["w_hh"].shape[0]
    n_out = params["w_out"].shape[1]
    assert FH == 4 * H and n_out <= FH and 2 * H <= FH

    row_whh = D
    row_b = D + H
    row_wout = _round_up(row_b + 1, 8)
    row_bout = row_wout + H
    n_rows = _round_up(row_bout + 1, 8)

    w_out_pad = jnp.zeros((H, FH), jnp.float32).at[:, :n_out].set(
        params["w_out"].astype(jnp.float32))
    b_out_pad = jnp.zeros((1, FH), jnp.float32).at[:, :n_out].set(
        params["b_out"].astype(jnp.float32))

    slab = jnp.zeros((n_rows, FH), jnp.float32)
    slab = slab.at[0:D].set(_permute_gate_columns(params["w_ih"]).astype(jnp.float32))
    slab = slab.at[row_whh:row_whh + H].set(
        _permute_gate_columns(params["w_hh"]).astype(jnp.float32))
    slab = slab.at[row_b:row_b + 1].set(
        _permute_gate_columns(params["b"]).astype(jnp.float32))
    slab = slab.at[row_wout:row_wout + H].set(w_out_pad)
    slab = slab.at[row_bout:row_bout + 1].set(b_out_pad)
    rows = dict(row_whh=row_whh, row_b=row_b, row_wout=row_wout, row_bout=row_bout)
    return slab, rows


def rnn_driver_forward(mu, log_var, eps, params, hidden=None, cell=None):
    """mu, log_var, eps: (B, T, D) batch-first, like the PyTorch module.

    Returns (outputs, (hidden, cell)) with outputs: (B, T, n_out),
    hidden/cell: (1, B, H), matching torch.nn.LSTM conventions.
    """
    B, T, D = mu.shape
    H = params["w_hh"].shape[0]
    n_out = params["w_out"].shape[1]
    FH = 4 * H
    BP = _round_up(B, 8)  # pad batch to the 8-sublane vreg boundary

    wslab, rows = _pack_params(params)

    # One stacked input: [mu, log_var, eps] -> time-major, batch-padded, flat rows.
    x3 = jnp.stack([mu, log_var, eps]).astype(jnp.float32)        # (3, B, T, D)
    x3 = jnp.transpose(x3, (0, 2, 1, 3))                          # (3, T, B, D)
    if BP != B:
        x3 = jnp.pad(x3, ((0, 0), (0, 0), (0, BP - B), (0, 0)))
    x3 = x3.reshape(3, T * BP, D)

    if hidden is None or cell is None:
        hc0 = jnp.zeros((2, BP, H), jnp.float32)
    else:
        hc0 = jnp.stack([hidden.reshape(B, H),
                         cell.reshape(B, H)]).astype(jnp.float32)
        if BP != B:
            hc0 = jnp.pad(hc0, ((0, 0), (0, BP - B), (0, 0)))

    out_rows = T * BP + BP

    kernel = functools.partial(rnn_driver_kernel, seq_len=T, batch=BP,
                               latent_dim=D, hidden_size=H, **rows)

    grid_spec = pltpu.PrefetchScalarGridSpec(
        num_scalar_prefetch=0,
        grid=(1,),
        in_specs=[
            pl.BlockSpec((3, T * BP, D), lambda i: (0, 0, 0)),    # stacked mu/log_var/eps
            pl.BlockSpec((2, BP, H), lambda i: (0, 0, 0)),        # stacked h0/c0
            pl.BlockSpec(wslab.shape, lambda i: (0, 0)),          # packed parameter slab
        ],
        out_specs=pl.BlockSpec((out_rows, FH), lambda i: (0, 0)), # combined output slab
    )

    slab = pl.pallas_call(
        kernel,
        grid_spec=grid_spec,
        out_shape=jax.ShapeDtypeStruct((out_rows, FH), jnp.float32),
        compiler_params=pltpu.CompilerParams(
            dimension_semantics=("arbitrary",)),  # single invocation; recurrence is serial
    )(x3, hc0, wslab)

    out_tm = slab[0:T * BP, 0:n_out].reshape(T, BP, n_out)[:, :B, :]
    outputs = jnp.transpose(out_tm, (1, 0, 2))                    # (B, T, n_out)
    hN = slab[T * BP:, 0:H][:B]
    cN = slab[T * BP:, H:2 * H][:B]
    return outputs, (hN[None], cN[None])


def ref_forward(mu, log_var, eps, params, hidden=None, cell=None):
    """Pure-JAX reference mirroring the PyTorch forward semantics (gate order [i,f,g,o])."""
    z = eps * jnp.exp(0.5 * log_var) + mu
    B, T, D = z.shape
    H = params["w_hh"].shape[0]
    h = jnp.zeros((B, H), jnp.float32) if hidden is None else hidden[0]
    c = jnp.zeros((B, H), jnp.float32) if cell is None else cell[0]

    def step(carry, x_t):
        h, c = carry
        gates = x_t @ params["w_ih"] + h @ params["w_hh"] + params["b"][0]
        i_g = jax.nn.sigmoid(gates[:, 0:H])
        f_g = jax.nn.sigmoid(gates[:, H:2 * H])
        g_g = jnp.tanh(gates[:, 2 * H:3 * H])
        o_g = jax.nn.sigmoid(gates[:, 3 * H:4 * H])
        c = f_g * c + i_g * g_g
        h = o_g * jnp.tanh(c)
        return (h, c), h

    (h, c), hs = lax.scan(step, (h, c), jnp.transpose(z, (1, 0, 2)))
    out = jnp.tanh(jnp.einsum("tbh,ho->tbo", hs, params["w_out"])
                   + params["b_out"][0])
    return jnp.transpose(out, (1, 0, 2)), (h[None], c[None])


def make_params(key, latent_dim, hidden_size, n_out):
    """Deterministic parameter init (PyTorch-style uniform(-1/sqrt(H), 1/sqrt(H)))."""
    k = 1.0 / jnp.sqrt(jnp.float32(hidden_size))
    keys = jax.random.split(key, 6)
    u = lambda kk, shape: jax.random.uniform(kk, shape, jnp.float32, -k, k)
    # Stored pre-transposed relative to PyTorch: W_ih^T (D,4H), W_hh^T (H,4H), W_out^T (H,n_out)
    # Gate column order is PyTorch's [i, f, g, o]; the wrapper permutes for the kernel.
    return {
        "w_ih": u(keys[0], (latent_dim, 4 * hidden_size)),
        "w_hh": u(keys[1], (hidden_size, 4 * hidden_size)),
        "b": u(keys[2], (1, 4 * hidden_size)) + u(keys[3], (1, 4 * hidden_size)),
        "w_out": u(keys[4], (hidden_size, n_out)),
        "b_out": u(keys[5], (1, n_out)),
    }


if __name__ == "__main__":
    B, T, D, H, N_OUT = 4, 8, 32, 32, 2  # batch, seq, latent_dim, hidden_size, outputs

    root = jax.random.PRNGKey(0)
    k_mu, k_lv, k_eps, k_par = jax.random.split(root, 4)

    mu = jax.random.normal(k_mu, (B, T, D), jnp.float32)
    log_var = jax.random.normal(k_lv, (B, T, D), jnp.float32) * 0.1
    # eps stands in for torch.randn_like in reparameterize (deterministic here)
    eps = jax.random.normal(k_eps, (B, T, D), jnp.float32)

    params = make_params(k_par, D, H, N_OUT)

    # hidden/cell = None -> init_hc (zeros), matching the PyTorch module
    outputs, (hidden, cell) = rnn_driver_forward(mu, log_var, eps, params,
                                                 hidden=None, cell=None)
    jax.block_until_ready((outputs, hidden, cell))

    ref_out, (ref_h, ref_c) = ref_forward(mu, log_var, eps, params)
    assert outputs.shape == (B, T, N_OUT)
    assert hidden.shape == (1, B, H) and cell.shape == (1, B, H)
    assert jnp.allclose(outputs, ref_out, atol=2e-5, rtol=2e-5)
    assert jnp.allclose(hidden, ref_h, atol=2e-5, rtol=2e-5)
    assert jnp.allclose(cell, ref_c, atol=2e-5, rtol=2e-5)

    print("KERNEL_OK")
</pallas_src>

<mosaic_0001>
module attributes {stable_mosaic.version = 11 : i64} {
  func.func @rnn_driver_kernel(%arg0: i32, %arg1: memref<3x64x32xf32, #tpu.memory_space<vmem>>, %arg2: memref<2x8x32xf32, #tpu.memory_space<vmem>>, %arg3: memref<112x128xf32, #tpu.memory_space<vmem>>, %arg4: memref<72x128xf32, #tpu.memory_space<vmem>>) attributes {dimension_semantics = [#tpu.dimension_semantics<arbitrary>], iteration_bounds = array<i64: 1>, scalar_prefetch = 0 : i64, scratch_operands = 0 : i64, tpu.core_type = #tpu.core_type<tc>, window_params = [{pipeline_mode = #tpu.pipeline_mode<synchronous>, transform_indices = @transform_0, window_bounds = array<i64: 3, 64, 32>}, {pipeline_mode = #tpu.pipeline_mode<synchronous>, transform_indices = @transform_1, window_bounds = array<i64: 2, 8, 32>}, {pipeline_mode = #tpu.pipeline_mode<synchronous>, transform_indices = @transform_2, window_bounds = array<i64: 112, 128>}, {pipeline_mode = #tpu.pipeline_mode<synchronous>, transform_indices = @transform_3, window_bounds = array<i64: 72, 128>}]} {
    %c2 = arith.constant 2 : index
    %c0 = arith.constant 0 : index
    %c0_0 = arith.constant 0 : index
    %0 = vector.load %arg1[%c2, %c0, %c0_0] : memref<3x64x32xf32, #tpu.memory_space<vmem>>, vector<1x64x32xf32>
    %1 = vector.shape_cast %0 : vector<1x64x32xf32> to vector<64x32xf32>
    %c1 = arith.constant 1 : index
    %c0_1 = arith.constant 0 : index
    %c0_2 = arith.constant 0 : index
    %2 = vector.load %arg1[%c1, %c0_1, %c0_2] : memref<3x64x32xf32, #tpu.memory_space<vmem>>, vector<1x64x32xf32>
    %3 = vector.shape_cast %2 : vector<1x64x32xf32> to vector<64x32xf32>
    %cst = arith.constant 5.000000e-01 : f32
    %4 = vector.broadcast %cst : f32 to vector<64x32xf32>
    %5 = arith.mulf %4, %3 : vector<64x32xf32>
    %6 = math.exp %5 : vector<64x32xf32>
    %7 = arith.mulf %1, %6 : vector<64x32xf32>
    %c0_3 = arith.constant 0 : index
    %c0_4 = arith.constant 0 : index
    %c0_5 = arith.constant 0 : index
    %8 = vector.load %arg1[%c0_3, %c0_4, %c0_5] : memref<3x64x32xf32, #tpu.memory_space<vmem>>, vector<1x64x32xf32>
    %9 = vector.shape_cast %8 : vector<1x64x32xf32> to vector<64x32xf32>
    %10 = arith.addf %7, %9 : vector<64x32xf32>
    %c0_6 = arith.constant 0 : index
    %c0_7 = arith.constant 0 : index
    %11 = vector.load %arg3[%c0_6, %c0_7] : memref<112x128xf32, #tpu.memory_space<vmem>>, vector<32x128xf32>
    %c32 = arith.constant 32 : index
    %c0_8 = arith.constant 0 : index
    %12 = vector.load %arg3[%c32, %c0_8] : memref<112x128xf32, #tpu.memory_space<vmem>>, vector<32x128xf32>
    %c64 = arith.constant 64 : index
    %c0_9 = arith.constant 0 : index
    %13 = vector.load %arg3[%c64, %c0_9] : memref<112x128xf32, #tpu.memory_space<vmem>>, vector<1x128xf32>
    %c72 = arith.constant 72 : index
    %c0_10 = arith.constant 0 : index
    %14 = vector.load %arg3[%c72, %c0_10] : memref<112x128xf32, #tpu.memory_space<vmem>>, vector<32x128xf32>
    %c104 = arith.constant 104 : index
    %c0_11 = arith.constant 0 : index
    %15 = vector.load %arg3[%c104, %c0_11] : memref<112x128xf32, #tpu.memory_space<vmem>>, vector<1x128xf32>
    %cst_12 = arith.constant dense<0.000000e+00> : vector<64x128xf32>
    %16 = tpu.matmul %10, %11, %cst_12 {dimension_numbers = #tpu.dot_dimension_numbers<[1], [0], [0], [1], [0, 0, 1, 1], [], []>} : vector<64x32xf32>, vector<32x128xf32>, vector<64x128xf32> -> vector<64x128xf32>
    %17 = vector.broadcast %13 : vector<1x128xf32> to vector<64x128xf32>
    %18 = arith.addf %16, %17 : vector<64x128xf32>
    %c0_13 = arith.constant 0 : index
    %c0_14 = arith.constant 0 : index
    %c0_15 = arith.constant 0 : index
    %19 = vector.load %arg2[%c0_13, %c0_14, %c0_15] : memref<2x8x32xf32, #tpu.memory_space<vmem>>, vector<1x8x32xf32>
    %20 = vector.shape_cast %19 : vector<1x8x32xf32> to vector<8x32xf32>
    %c1_16 = arith.constant 1 : index
    %c0_17 = arith.constant 0 : index
    %c0_18 = arith.constant 0 : index
    %21 = vector.load %arg2[%c1_16, %c0_17, %c0_18] : memref<2x8x32xf32, #tpu.memory_space<vmem>>, vector<1x8x32xf32>
    %22 = vector.shape_cast %21 : vector<1x8x32xf32> to vector<8x32xf32>
    %23 = vector.extract_strided_slice %18 {offsets = [0, 0], sizes = [8, 128], strides = [1, 1]} : vector<64x128xf32> to vector<8x128xf32>
    %cst_19 = arith.constant dense<0.000000e+00> : vector<8x128xf32>
    %24 = tpu.matmul %20, %12, %cst_19 {dimension_numbers = #tpu.dot_dimension_numbers<[1], [0], [0], [1], [0, 0, 1, 1], [], []>} : vector<8x32xf32>, vector<32x128xf32>, vector<8x128xf32> -> vector<8x128xf32>
    %25 = arith.addf %23, %24 : vector<8x128xf32>
    %26 = vector.extract_strided_slice %25 {offsets = [0, 0], sizes = [8, 96], strides = [1, 1]} : vector<8x128xf32> to vector<8x96xf32>
    %27 = arith.negf %26 : vector<8x96xf32>
    %28 = math.exp %27 : vector<8x96xf32>
    %cst_20 = arith.constant 1.000000e+00 : f32
    %29 = vector.broadcast %cst_20 : f32 to vector<8x96xf32>
    %30 = arith.addf %29, %28 : vector<8x96xf32>
    %31 = arith.divf %29, %30 : vector<8x96xf32>
    %32 = vector.extract_strided_slice %25 {offsets = [0, 96], sizes = [8, 32], strides = [1, 1]} : vector<8x128xf32> to vector<8x32xf32>
    %33 = math.tanh %32 : vector<8x32xf32>
    %34 = vector.extract_strided_slice %31 {offsets = [0, 0], sizes = [8, 32], strides = [1, 1]} : vector<8x96xf32> to vector<8x32xf32>
    %35 = vector.extract_strided_slice %31 {offsets = [0, 32], sizes = [8, 32], strides = [1, 1]} : vector<8x96xf32> to vector<8x32xf32>
    %36 = vector.extract_strided_slice %31 {offsets = [0, 64], sizes = [8, 32], strides = [1, 1]} : vector<8x96xf32> to vector<8x32xf32>
    %37 = arith.mulf %35, %22 : vector<8x32xf32>
    %38 = arith.mulf %34, %33 : vector<8x32xf32>
    %39 = arith.addf %37, %38 : vector<8x32xf32>
    %40 = math.tanh %39 : vector<8x32xf32>
    %41 = arith.mulf %36, %40 : vector<8x32xf32>
    %42 = vector.extract_strided_slice %18 {offsets = [8, 0], sizes = [8, 128], strides = [1, 1]} : vector<64x128xf32> to vector<8x128xf32>
    %cst_21 = arith.constant dense<0.000000e+00> : vector<8x128xf32>
    %43 = tpu.matmul %41, %12, %cst_21 {dimension_numbers = #tpu.dot_dimension_numbers<[1], [0], [0], [1], [0, 0, 1, 1], [], []>} : vector<8x32xf32>, vector<32x128xf32>, vector<8x128xf32> -> vector<8x128xf32>
    %44 = arith.addf %42, %43 : vector<8x128xf32>
    %45 = vector.extract_strided_slice %44 {offsets = [0, 0], sizes = [8, 96], strides = [1, 1]} : vector<8x128xf32> to vector<8x96xf32>
    %46 = arith.negf %45 : vector<8x96xf32>
    %47 = math.exp %46 : vector<8x96xf32>
    %cst_22 = arith.constant 1.000000e+00 : f32
    %48 = vector.broadcast %cst_22 : f32 to vector<8x96xf32>
    %49 = arith.addf %48, %47 : vector<8x96xf32>
    %50 = arith.divf %48, %49 : vector<8x96xf32>
    %51 = vector.extract_strided_slice %44 {offsets = [0, 96], sizes = [8, 32], strides = [1, 1]} : vector<8x128xf32> to vector<8x32xf32>
    %52 = math.tanh %51 : vector<8x32xf32>
    %53 = vector.extract_strided_slice %50 {offsets = [0, 0], sizes = [8, 32], strides = [1, 1]} : vector<8x96xf32> to vector<8x32xf32>
    %54 = vector.extract_strided_slice %50 {offsets = [0, 32], sizes = [8, 32], strides = [1, 1]} : vector<8x96xf32> to vector<8x32xf32>
    %55 = vector.extract_strided_slice %50 {offsets = [0, 64], sizes = [8, 32], strides = [1, 1]} : vector<8x96xf32> to vector<8x32xf32>
    %56 = arith.mulf %54, %39 : vector<8x32xf32>
    %57 = arith.mulf %53, %52 : vector<8x32xf32>
    %58 = arith.addf %56, %57 : vector<8x32xf32>
    %59 = math.tanh %58 : vector<8x32xf32>
    %60 = arith.mulf %55, %59 : vector<8x32xf32>
    %61 = vector.extract_strided_slice %18 {offsets = [16, 0], sizes = [8, 128], strides = [1, 1]} : vector<64x128xf32> to vector<8x128xf32>
    %cst_23 = arith.constant dense<0.000000e+00> : vector<8x128xf32>
    %62 = tpu.matmul %60, %12, %cst_23 {dimension_numbers = #tpu.dot_dimension_numbers<[1], [0], [0], [1], [0, 0, 1, 1], [], []>} : vector<8x32xf32>, vector<32x128xf32>, vector<8x128xf32> -> vector<8x128xf32>
    %63 = arith.addf %61, %62 : vector<8x128xf32>
    %64 = vector.extract_strided_slice %63 {offsets = [0, 0], sizes = [8, 96], strides = [1, 1]} : vector<8x128xf32> to vector<8x96xf32>
    %65 = arith.negf %64 : vector<8x96xf32>
    %66 = math.exp %65 : vector<8x96xf32>
    %cst_24 = arith.constant 1.000000e+00 : f32
    %67 = vector.broadcast %cst_24 : f32 to vector<8x96xf32>
    %68 = arith.addf %67, %66 : vector<8x96xf32>
    %69 = arith.divf %67, %68 : vector<8x96xf32>
    %70 = vector.extract_strided_slice %63 {offsets = [0, 96], sizes = [8, 32], strides = [1, 1]} : vector<8x128xf32> to vector<8x32xf32>
    %71 = math.tanh %70 : vector<8x32xf32>
    %72 = vector.extract_strided_slice %69 {offsets = [0, 0], sizes = [8, 32], strides = [1, 1]} : vector<8x96xf32> to vector<8x32xf32>
    %73 = vector.extract_strided_slice %69 {offsets = [0, 32], sizes = [8, 32], strides = [1, 1]} : vector<8x96xf32> to vector<8x32xf32>
    %74 = vector.extract_strided_slice %69 {offsets = [0, 64], sizes = [8, 32], strides = [1, 1]} : vector<8x96xf32> to vector<8x32xf32>
    %75 = arith.mulf %73, %58 : vector<8x32xf32>
    %76 = arith.mulf %72, %71 : vector<8x32xf32>
    %77 = arith.addf %75, %76 : vector<8x32xf32>
    %78 = math.tanh %77 : vector<8x32xf32>
    %79 = arith.mulf %74, %78 : vector<8x32xf32>
    %80 = vector.extract_strided_slice %18 {offsets = [24, 0], sizes = [8, 128], strides = [1, 1]} : vector<64x128xf32> to vector<8x128xf32>
    %cst_25 = arith.constant dense<0.000000e+00> : vector<8x128xf32>
    %81 = tpu.matmul %79, %12, %cst_25 {dimension_numbers = #tpu.dot_dimension_numbers<[1], [0], [0], [1], [0, 0, 1, 1], [], []>} : vector<8x32xf32>, vector<32x128xf32>, vector<8x128xf32> -> vector<8x128xf32>
    %82 = arith.addf %80, %81 : vector<8x128xf32>
    %83 = vector.extract_strided_slice %82 {offsets = [0, 0], sizes = [8, 96], strides = [1, 1]} : vector<8x128xf32> to vector<8x96xf32>
    %84 = arith.negf %83 : vector<8x96xf32>
    %85 = math.exp %84 : vector<8x96xf32>
    %cst_26 = arith.constant 1.000000e+00 : f32
    %86 = vector.broadcast %cst_26 : f32 to vector<8x96xf32>
    %87 = arith.addf %86, %85 : vector<8x96xf32>
    %88 = arith.divf %86, %87 : vector<8x96xf32>
    %89 = vector.extract_strided_slice %82 {offsets = [0, 96], sizes = [8, 32], strides = [1, 1]} : vector<8x128xf32> to vector<8x32xf32>
    %90 = math.tanh %89 : vector<8x32xf32>
    %91 = vector.extract_strided_slice %88 {offsets = [0, 0], sizes = [8, 32], strides = [1, 1]} : vector<8x96xf32> to vector<8x32xf32>
    %92 = vector.extract_strided_slice %88 {offsets = [0, 32], sizes = [8, 32], strides = [1, 1]} : vector<8x96xf32> to vector<8x32xf32>
    %93 = vector.extract_strided_slice %88 {offsets = [0, 64], sizes = [8, 32], strides = [1, 1]} : vector<8x96xf32> to vector<8x32xf32>
    %94 = arith.mulf %92, %77 : vector<8x32xf32>
    %95 = arith.mulf %91, %90 : vector<8x32xf32>
    %96 = arith.addf %94, %95 : vector<8x32xf32>
    %97 = math.tanh %96 : vector<8x32xf32>
    %98 = arith.mulf %93, %97 : vector<8x32xf32>
    %99 = vector.extract_strided_slice %18 {offsets = [32, 0], sizes = [8, 128], strides = [1, 1]} : vector<64x128xf32> to vector<8x128xf32>
    %cst_27 = arith.constant dense<0.000000e+00> : vector<8x128xf32>
    %100 = tpu.matmul %98, %12, %cst_27 {dimension_numbers = #tpu.dot_dimension_numbers<[1], [0], [0], [1], [0, 0, 1, 1], [], []>} : vector<8x32xf32>, vector<32x128xf32>, vector<8x128xf32> -> vector<8x128xf32>
    %101 = arith.addf %99, %100 : vector<8x128xf32>
    %102 = vector.extract_strided_slice %101 {offsets = [0, 0], sizes = [8, 96], strides = [1, 1]} : vector<8x128xf32> to vector<8x96xf32>
    %103 = arith.negf %102 : vector<8x96xf32>
    %104 = math.exp %103 : vector<8x96xf32>
    %cst_28 = arith.constant 1.000000e+00 : f32
    %105 = vector.broadcast %cst_28 : f32 to vector<8x96xf32>
    %106 = arith.addf %105, %104 : vector<8x96xf32>
    %107 = arith.divf %105, %106 : vector<8x96xf32>
    %108 = vector.extract_strided_slice %101 {offsets = [0, 96], sizes = [8, 32], strides = [1, 1]} : vector<8x128xf32> to vector<8x32xf32>
    %109 = math.tanh %108 : vector<8x32xf32>
    %110 = vector.extract_strided_slice %107 {offsets = [0, 0], sizes = [8, 32], strides = [1, 1]} : vector<8x96xf32> to vector<8x32xf32>
    %111 = vector.extract_strided_slice %107 {offsets = [0, 32], sizes = [8, 32], strides = [1, 1]} : vector<8x96xf32> to vector<8x32xf32>
    %112 = vector.extract_strided_slice %107 {offsets = [0, 64], sizes = [8, 32], strides = [1, 1]} : vector<8x96xf32> to vector<8x32xf32>
    %113 = arith.mulf %111, %96 : vector<8x32xf32>
    %114 = arith.mulf %110, %109 : vector<8x32xf32>
    %115 = arith.addf %113, %114 : vector<8x32xf32>
    %116 = math.tanh %115 : vector<8x32xf32>
    %117 = arith.mulf %112, %116 : vector<8x32xf32>
    %118 = vector.extract_strided_slice %18 {offsets = [40, 0], sizes = [8, 128], strides = [1, 1]} : vector<64x128xf32> to vector<8x128xf32>
    %cst_29 = arith.constant dense<0.000000e+00> : vector<8x128xf32>
    %119 = tpu.matmul %117, %12, %cst_29 {dimension_numbers = #tpu.dot_dimension_numbers<[1], [0], [0], [1], [0, 0, 1, 1], [], []>} : vector<8x32xf32>, vector<32x128xf32>, vector<8x128xf32> -> vector<8x128xf32>
    %120 = arith.addf %118, %119 : vector<8x128xf32>
    %121 = vector.extract_strided_slice %120 {offsets = [0, 0], sizes = [8, 96], strides = [1, 1]} : vector<8x128xf32> to vector<8x96xf32>
    %122 = arith.negf %121 : vector<8x96xf32>
    %123 = math.exp %122 : vector<8x96xf32>
    %cst_30 = arith.constant 1.000000e+00 : f32
    %124 = vector.broadcast %cst_30 : f32 to vector<8x96xf32>
    %125 = arith.addf %124, %123 : vector<8x96xf32>
    %126 = arith.divf %124, %125 : vector<8x96xf32>
    %127 = vector.extract_strided_slice %120 {offsets = [0, 96], sizes = [8, 32], strides = [1, 1]} : vector<8x128xf32> to vector<8x32xf32>
    %128 = math.tanh %127 : vector<8x32xf32>
    %129 = vector.extract_strided_slice %126 {offsets = [0, 0], sizes = [8, 32], strides = [1, 1]} : vector<8x96xf32> to vector<8x32xf32>
    %130 = vector.extract_strided_slice %126 {offsets = [0, 32], sizes = [8, 32], strides = [1, 1]} : vector<8x96xf32> to vector<8x32xf32>
    %131 = vector.extract_strided_slice %126 {offsets = [0, 64], sizes = [8, 32], strides = [1, 1]} : vector<8x96xf32> to vector<8x32xf32>
    %132 = arith.mulf %130, %115 : vector<8x32xf32>
    %133 = arith.mulf %129, %128 : vector<8x32xf32>
    %134 = arith.addf %132, %133 : vector<8x32xf32>
    %135 = math.tanh %134 : vector<8x32xf32>
    %136 = arith.mulf %131, %135 : vector<8x32xf32>
    %137 = vector.extract_strided_slice %18 {offsets = [48, 0], sizes = [8, 128], strides = [1, 1]} : vector<64x128xf32> to vector<8x128xf32>
    %cst_31 = arith.constant dense<0.000000e+00> : vector<8x128xf32>
    %138 = tpu.matmul %136, %12, %cst_31 {dimension_numbers = #tpu.dot_dimension_numbers<[1], [0], [0], [1], [0, 0, 1, 1], [], []>} : vector<8x32xf32>, vector<32x128xf32>, vector<8x128xf32> -> vector<8x128xf32>
    %139 = arith.addf %137, %138 : vector<8x128xf32>
    %140 = vector.extract_strided_slice %139 {offsets = [0, 0], sizes = [8, 96], strides = [1, 1]} : vector<8x128xf32> to vector<8x96xf32>
    %141 = arith.negf %140 : vector<8x96xf32>
    %142 = math.exp %141 : vector<8x96xf32>
    %cst_32 = arith.constant 1.000000e+00 : f32
    %143 = vector.broadcast %cst_32 : f32 to vector<8x96xf32>
    %144 = arith.addf %143, %142 : vector<8x96xf32>
    %145 = arith.divf %143, %144 : vector<8x96xf32>
    %146 = vector.extract_strided_slice %139 {offsets = [0, 96], sizes = [8, 32], strides = [1, 1]} : vector<8x128xf32> to vector<8x32xf32>
    %147 = math.tanh %146 : vector<8x32xf32>
    %148 = vector.extract_strided_slice %145 {offsets = [0, 0], sizes = [8, 32], strides = [1, 1]} : vector<8x96xf32> to vector<8x32xf32>
    %149 = vector.extract_strided_slice %145 {offsets = [0, 32], sizes = [8, 32], strides = [1, 1]} : vector<8x96xf32> to vector<8x32xf32>
    %150 = vector.extract_strided_slice %145 {offsets = [0, 64], sizes = [8, 32], strides = [1, 1]} : vector<8x96xf32> to vector<8x32xf32>
    %151 = arith.mulf %149, %134 : vector<8x32xf32>
    %152 = arith.mulf %148, %147 : vector<8x32xf32>
    %153 = arith.addf %151, %152 : vector<8x32xf32>
    %154 = math.tanh %153 : vector<8x32xf32>
    %155 = arith.mulf %150, %154 : vector<8x32xf32>
    %156 = vector.extract_strided_slice %18 {offsets = [56, 0], sizes = [8, 128], strides = [1, 1]} : vector<64x128xf32> to vector<8x128xf32>
    %cst_33 = arith.constant dense<0.000000e+00> : vector<8x128xf32>
    %157 = tpu.matmul %155, %12, %cst_33 {dimension_numbers = #tpu.dot_dimension_numbers<[1], [0], [0], [1], [0, 0, 1, 1], [], []>} : vector<8x32xf32>, vector<32x128xf32>, vector<8x128xf32> -> vector<8x128xf32>
    %158 = arith.addf %156, %157 : vector<8x128xf32>
    %159 = vector.extract_strided_slice %158 {offsets = [0, 0], sizes = [8, 96], strides = [1, 1]} : vector<8x128xf32> to vector<8x96xf32>
    %160 = arith.negf %159 : vector<8x96xf32>
    %161 = math.exp %160 : vector<8x96xf32>
    %cst_34 = arith.constant 1.000000e+00 : f32
    %162 = vector.broadcast %cst_34 : f32 to vector<8x96xf32>
    %163 = arith.addf %162, %161 : vector<8x96xf32>
    %164 = arith.divf %162, %163 : vector<8x96xf32>
    %165 = vector.extract_strided_slice %158 {offsets = [0, 96], sizes = [8, 32], strides = [1, 1]} : vector<8x128xf32> to vector<8x32xf32>
    %166 = math.tanh %165 : vector<8x32xf32>
    %167 = vector.extract_strided_slice %164 {offsets = [0, 0], sizes = [8, 32], strides = [1, 1]} : vector<8x96xf32> to vector<8x32xf32>
    %168 = vector.extract_strided_slice %164 {offsets = [0, 32], sizes = [8, 32], strides = [1, 1]} : vector<8x96xf32> to vector<8x32xf32>
    %169 = vector.extract_strided_slice %164 {offsets = [0, 64], sizes = [8, 32], strides = [1, 1]} : vector<8x96xf32> to vector<8x32xf32>
    %170 = arith.mulf %168, %153 : vector<8x32xf32>
    %171 = arith.mulf %167, %166 : vector<8x32xf32>
    %172 = arith.addf %170, %171 : vector<8x32xf32>
    %173 = math.tanh %172 : vector<8x32xf32>
    %174 = arith.mulf %169, %173 : vector<8x32xf32>
    %175 = tpu.concatenate %41, %60, %79, %98, %117, %136, %155, %174 in 0 : vector<8x32xf32>, vector<8x32xf32>, vector<8x32xf32>, vector<8x32xf32>, vector<8x32xf32>, vector<8x32xf32>, vector<8x32xf32>, vector<8x32xf32> -> vector<64x32xf32>
    %cst_35 = arith.constant dense<0.000000e+00> : vector<64x128xf32>
    %176 = tpu.matmul %175, %14, %cst_35 {dimension_numbers = #tpu.dot_dimension_numbers<[1], [0], [0], [1], [0, 0, 1, 1], [], []>} : vector<64x32xf32>, vector<32x128xf32>, vector<64x128xf32> -> vector<64x128xf32>
    %177 = vector.broadcast %15 : vector<1x128xf32> to vector<64x128xf32>
    %178 = arith.addf %176, %177 : vector<64x128xf32>
    %179 = math.tanh %178 : vector<64x128xf32>
    %c0_36 = arith.constant 0 : index
    %c0_37 = arith.constant 0 : index
    %180 = vector.load %arg4[%c0_36, %c0_37] : memref<72x128xf32, #tpu.memory_space<vmem>>, vector<64x128xf32>
    tpu.vector_store %arg4[%c0_36, %c0_37], %179 {strides = array<i32>} : memref<72x128xf32, #tpu.memory_space<vmem>>, vector<64x128xf32>,
    %c64_38 = arith.constant 64 : index
    %c0_39 = arith.constant 0 : index
    %181 = vector.load %arg4[%c64_38, %c0_39] : memref<72x128xf32, #tpu.memory_space<vmem>>, vector<8x32xf32>
    tpu.vector_store %arg4[%c64_38, %c0_39], %174 {strides = array<i32>} : memref<72x128xf32, #tpu.memory_space<vmem>>, vector<8x32xf32>,
    %c64_40 = arith.constant 64 : index
    %c32_41 = arith.constant 32 : index
    %182 = vector.load %arg4[%c64_40, %c32_41] : memref<72x128xf32, #tpu.memory_space<vmem>>, vector<8x32xf32>
    tpu.vector_store %arg4[%c64_40, %c32_41], %172 {strides = array<i32>} : memref<72x128xf32, #tpu.memory_space<vmem>>, vector<8x32xf32>,
    return
  }
  func.func @transform_0(%arg0: i32) -> (i32, i32, i32) {
    %c0_i32 = arith.constant 0 : i32
    %c0_i32_0 = arith.constant 0 : i32
    %c0_i32_1 = arith.constant 0 : i32
    %c0_i32_2 = arith.constant 0 : i32
    return %c0_i32, %c0_i32_0, %c0_i32_1 : i32, i32, i32
  }
  func.func @transform_1(%arg0: i32) -> (i32, i32, i32) {
    %c0_i32 = arith.constant 0 : i32
    %c0_i32_0 = arith.constant 0 : i32
    %c0_i32_1 = arith.constant 0 : i32
    %c0_i32_2 = arith.constant 0 : i32
    return %c0_i32, %c0_i32_0, %c0_i32_1 : i32, i32, i32
  }
  func.func @transform_2(%arg0: i32) -> (i32, i32) {
    %c0_i32 = arith.constant 0 : i32
    %c0_i32_0 = arith.constant 0 : i32
    %c0_i32_1 = arith.constant 0 : i32
    return %c0_i32, %c0_i32_0 : i32, i32
  }
  func.func @transform_3(%arg0: i32) -> (i32, i32) {
    %c0_i32 = arith.constant 0 : i32
    %c0_i32_0 = arith.constant 0 : i32
    %c0_i32_1 = arith.constant 0 : i32
    return %c0_i32, %c0_i32_0 : i32, i32
  }
}

</mosaic_0001>

<llo_original>
// kernel: tpu_custom_call.1
$region0: #{tpu_custom_call.1}
  #allocation0 [shape = 'u32[]', space=smem, size = 0x4, offset = 0x4, fixed_abs, tag = 'smem constant byte address 0x4 - core index']
  #allocation1 [shape = 'u32[144,128]{1,0:T(1,128)}', space=vmem, size = 0x12000, scoped, tag = 'internal scratch']
  %s0 = inlined_call_operand.vmem [shape: f32[3,64,32], index: 0, kind: input, shape index: {}]
  %s1 = inlined_call_operand.vmem [shape: f32[2,8,32], index: 1, kind: input, shape index: {}]
  %s2 = inlined_call_operand.vmem [shape: f32[112,128], index: 2, kind: input, shape index: {}]
  %s3 = inlined_call_operand.hbm [shape: f32[72,128], index: 3, kind: output, shape index: {}]
  %s4 = sld [smem:[#allocation0]]
  $region22: #{tpu_custom_call.1} parent=0
    _
  %s6 = ssub.s32 1, %s4
  %s7 = scalar_select 0, %s6, %s4
  $region1: #{tpu_custom_call.1} parent=0
    #allocation2 [shape = 'u8[36864]{0}', space=vmem, size = 0x9000, scoped, tag = 'output window, operand 0, single buffered']
    #allocation3 [shape = 's32[1]{0}', space=sflag, size = 0x4, scoped, tag = 'scoped memory for tpu_custom_call.1']
    %8 = vsyncpa [#allocation3], 0
    // Predicated region
    $region2: #{tpu_custom_call.1} parent=1 // pred_check
      _
    $region3: #{tpu_custom_call.1} parent=1 // pred_check_branch
      %10 = sbr.rel (0) target = $region5
    $region4: #{tpu_custom_call.1} parent=1 // pred_region
      _
    $region5: #{tpu_custom_call.1} parent=1 // pred_fallthru
      _
    // Predicated region
    $region6: #{tpu_custom_call.1} parent=1 // pred_check
      _
    $region7: #{tpu_custom_call.1} parent=1 // pred_check_branch
      %12 = sbr.rel (0) target = $region9
    $region8: #{tpu_custom_call.1} parent=1 // pred_region
      _
    $region9: #{tpu_custom_call.1} parent=1 // pred_fallthru
      _
    // Predicated region
    $region10: #{tpu_custom_call.1} parent=1 // pred_check
      _
    $region11: #{tpu_custom_call.1} parent=1 // pred_check_branch
      %14 = sbr.rel (0) target = $region13
    $region12: #{tpu_custom_call.1} parent=1 // pred_region
      _
    $region13: #{tpu_custom_call.1} parent=1 // pred_fallthru
      _
    %s15 = scalar_lea.vmem %s0, 128
    %v16 = vld [vmem:[%s15] sm:$0xff]
    %v17 = vld [vmem:[%s15 + $0x8] sm:$0xff]
    %v18 = vld [vmem:[%s15 + $0x10] sm:$0xff]
    %v19 = vld [vmem:[%s15 + $0x18] sm:$0xff]
    %v20 = vld [vmem:[%s15 + $0x20] sm:$0xff]
    %v21 = vld [vmem:[%s15 + $0x28] sm:$0xff]
    %v22 = vld [vmem:[%s15 + $0x30] sm:$0xff]
    %v23 = vld [vmem:[%s15 + $0x38] sm:$0xff]
    %s24 = scalar_lea.vmem %s0, 64
    %v25 = vld [vmem:[%s24] sm:$0xff]
    %v26 = vld [vmem:[%s24 + $0x8] sm:$0xff]
    %v27 = vld [vmem:[%s24 + $0x10] sm:$0xff]
    %v28 = vld [vmem:[%s24 + $0x18] sm:$0xff]
    %v29 = vld [vmem:[%s24 + $0x20] sm:$0xff]
    %v30 = vld [vmem:[%s24 + $0x28] sm:$0xff]
    %v31 = vld [vmem:[%s24 + $0x30] sm:$0xff]
    %v32 = vld [vmem:[%s24 + $0x38] sm:$0xff]
    %v33 = vmul.f32 %v25, 0.5
    %v34 = vmul.f32 %v26, 0.5
    %v35 = vmul.f32 %v27, 0.5
    %v36 = vmul.f32 %v28, 0.5
    %v37 = vmul.f32 %v29, 0.5
    %v38 = vmul.f32 %v30, 0.5
    %v39 = vmul.f32 %v31, 0.5
    %v40 = vmul.f32 %v32, 0.5
    %v41 = vmul.f32 %v33, 1.442695
    %v42 = vpow.pop %v41
    %v43 = vmul.f32 %v34, 1.442695
    %v44 = vpow.pop %v43
    %v45 = vmul.f32 %v35, 1.442695
    %v46 = vpow.pop %v45
    %v47 = vmul.f32 %v36, 1.442695
    %v48 = vpow.pop %v47
    %v49 = vmul.f32 %v37, 1.442695
    %v50 = vpow.pop %v49
    %v51 = vmul.f32 %v38, 1.442695
    %v52 = vpow.pop %v51
    %v53 = vmul.f32 %v39, 1.442695
    %v54 = vpow.pop %v53
    %v55 = vmul.f32 %v40, 1.442695
    %v56 = vpow.pop %v55
    %v57 = vmul.f32 %v16, %v42
    %v58 = vmul.f32 %v17, %v44
    %v59 = vmul.f32 %v18, %v46
    %v60 = vmul.f32 %v19, %v48
    %v61 = vmul.f32 %v20, %v50
    %v62 = vmul.f32 %v21, %v52
    %v63 = vmul.f32 %v22, %v54
    %v64 = vmul.f32 %v23, %v56
    %v65 = vld [vmem:[%s0] sm:$0xff]
    %v66 = vld [vmem:[%s0 + $0x8] sm:$0xff]
    %v67 = vld [vmem:[%s0 + $0x10] sm:$0xff]
    %v68 = vld [vmem:[%s0 + $0x18] sm:$0xff]
    %v69 = vld [vmem:[%s0 + $0x20] sm:$0xff]
    %v70 = vld [vmem:[%s0 + $0x28] sm:$0xff]
    %v71 = vld [vmem:[%s0 + $0x30] sm:$0xff]
    %v72 = vld [vmem:[%s0 + $0x38] sm:$0xff]
    %v73 = vadd.f32 %v57, %v65
    %v74 = vadd.f32 %v58, %v66
    %v75 = vadd.f32 %v59, %v67
    %v76 = vadd.f32 %v60, %v68
    %v77 = vadd.f32 %v61, %v69
    %v78 = vadd.f32 %v62, %v70
    %v79 = vadd.f32 %v63, %v71
    %v80 = vadd.f32 %v64, %v72
    %v81 = vld [vmem:[%s2] sm:$0xff]
    %v82 = vld [vmem:[%s2 + $0x8] sm:$0xff]
    %v83 = vld [vmem:[%s2 + $0x10] sm:$0xff]
    %v84 = vld [vmem:[%s2 + $0x18] sm:$0xff]
    %v85 = vld [vmem:[%s2 + $0x20] sm:$0xff]
    %v86 = vld [vmem:[%s2 + $0x28] sm:$0xff]
    %v87 = vld [vmem:[%s2 + $0x30] sm:$0xff]
    %v88 = vld [vmem:[%s2 + $0x38] sm:$0xff]
    %v89 = vld [vmem:[%s2 + $0x40] sm:$0x1]
    %v90 = vld [vmem:[%s2 + $0x48] sm:$0xff]
    %v91 = vld [vmem:[%s2 + $0x50] sm:$0xff]
    %v92 = vld [vmem:[%s2 + $0x58] sm:$0xff]
    %v93 = vld [vmem:[%s2 + $0x60] sm:$0xff]
    %v94 = vld [vmem:[%s2 + $0x68] sm:$0x1]
    %v95 = vlaneseq
    %v96 = vshrl.u32 %v95, 7
    %v97 = vsub.s32 0, %v96
    %v98 = vrot.slane %v89, %v97
    %vm99 = vcmask 261120
    %v101 = vsel %vm99, %v73, 0
    %v104 = vsel %vm99, %v74, 0
    %v107 = vsel %vm99, %v75, 0
    %v110 = vsel %vm99, %v76, 0
    %v113 = vsel %vm99, %v77, 0
    %v116 = vsel %vm99, %v78, 0
    %v119 = vsel %vm99, %v79, 0
    %v122 = vsel %vm99, %v80, 0
    %124 = vmatprep.subr.mxu0 0.0
    %125 = vmatpush1.msra.mxu0 %v81
    %126 = vmatprep.subr.mxu0 0.0
    %127 = vmatpush1.msra.mxu0 %v82
    %128 = vmatprep.subr.mxu0 0.0
    %129 = vmatpush1.msra.mxu0 %v83
    %130 = vmatprep.subr.mxu0 0.0
    %131 = vmatpush1.msra.mxu0 %v84
    %132 = vmatprep.subr.mxu0 0.0
    %133 = vmatpush1.msra.mxu0 0.0
    %134 = vmatprep.subr.mxu0 0.0
    %135 = vmatpush1.msra.mxu0 0.0
    %136 = vmatprep.subr.mxu0 0.0
    %137 = vmatpush1.msra.mxu0 0.0
    %138 = vmatprep.subr.mxu0 0.0
    %139 = vmatpush1.msra.mxu0 0.0
    %140 = vmatprep.subr.mxu0 0.0
    %141 = vmatpush1.msra.mxu0 0.0
    %142 = vmatprep.subr.mxu0 0.0
    %143 = vmatpush1.msra.mxu0 0.0
    %144 = vmatprep.subr.mxu0 0.0
    %145 = vmatpush1.msra.mxu0 0.0
    %146 = vmatprep.subr.mxu0 0.0
    %147 = vmatpush1.msra.mxu0 0.0
    %148 = vmatprep.subr.mxu0 0.0
    %149 = vmatpush1.msra.mxu0 0.0
    %150 = vmatprep.subr.mxu0 0.0
    %151 = vmatpush1.msra.mxu0 0.0
    %152 = vmatprep.subr.mxu0 0.0
    %153 = vmatpush1.msra.mxu0 0.0
    %154 = vmatprep.subr.mxu0 0.0
    %155 = vmatpush1.msra.mxu0 0.0
    %156 = vmatprep.subr.mxu0 0.0
    %157 = vmatpush1.msra.mxu0 0.0
    %158 = vmatprep.subr.mxu0 0.0
    %159 = vmatpush1.msra.mxu0 0.0
    %160 = vmatprep.subr.mxu0 0.0
    %161 = vmatpush1.msra.mxu0 0.0
    %162 = vmatprep.subr.mxu0 0.0
    %163 = vmatpush1.msra.mxu0 0.0
    %164 = vmatprep.subr.mxu0 0.0
    %165 = vmatpush1.msra.mxu0 0.0
    %166 = vmatprep.subr.mxu0 0.0
    %167 = vmatpush1.msra.mxu0 0.0
    %168 = vmatprep.subr.mxu0 0.0
    %169 = vmatpush1.msra.mxu0 0.0
    %170 = vmatprep.subr.mxu0 0.0
    %171 = vmatpush1.msra.mxu0 0.0
    %172 = vmatprep.subr.mxu0 0.0
    %173 = vmatpush1.msra.mxu0 0.0
    %174 = vmatprep.subr.mxu0 0.0
    %175 = vmatpush1.msra.mxu0 0.0
    %176 = vmatprep.subr.mxu0 0.0
    %177 = vmatpush1.msra.mxu0 0.0
    %178 = vmatprep.subr.mxu0 0.0
    %179 = vmatpush1.msra.mxu0 0.0
    %180 = vmatprep.subr.mxu0 0.0
    %181 = vmatpush1.msra.mxu0 0.0
    %182 = vmatprep.subr.mxu0 0.0
    %183 = vmatpush1.msra.mxu0 0.0
    %184 = vmatprep.subr.mxu0 0.0
    %185 = vmatpush1.msra.mxu0 0.0
    %186 = vmatprep.subr.mxu0 0.0
    %187 = vmatpush1.msra.mxu0 0.0
    %188 = vmatprep.mubr.f32.mxu0 0.0
    %189 = vmatmul.mubr.f32.gmra.mrb[0].mxu0 %v101
    %v190 = vpop.f32.mrb[0].mxu0
    %v191 = vadd.f32 %v98, %v190
    %v192 = vpop.f32.mrb[0].mxu0
    %193 = vmatprep.mubr.f32.mxu0 0.0
    %194 = vmatmul.mubr.f32.gmra.mrb[0].mxu0 %v104
    %v195 = vpop.f32.mrb[0].mxu0
    %v196 = vadd.f32 %v98, %v195
    %v197 = vpop.f32.mrb[0].mxu0
    %198 = vmatprep.mubr.f32.mxu0 0.0
    %199 = vmatmul.mubr.f32.gmra.mrb[0].mxu0 %v107
    %v200 = vpop.f32.mrb[0].mxu0
    %v201 = vadd.f32 %v98, %v200
    %v202 = vpop.f32.mrb[0].mxu0
    %203 = vmatprep.mubr.f32.mxu0 0.0
    %204 = vmatmul.mubr.f32.gmra.mrb[0].mxu0 %v110
    %v205 = vpop.f32.mrb[0].mxu0
    %v206 = vadd.f32 %v98, %v205
    %v207 = vpop.f32.mrb[0].mxu0
    %208 = vmatprep.mubr.f32.mxu0 0.0
    %209 = vmatmul.mubr.f32.gmra.mrb[0].mxu0 %v113
    %v210 = vpop.f32.mrb[0].mxu0
    %v211 = vadd.f32 %v98, %v210
    %v212 = vpop.f32.mrb[0].mxu0
    %213 = vmatprep.mubr.f32.mxu0 0.0
    %214 = vmatmul.mubr.f32.gmra.mrb[0].mxu0 %v116
    %v215 = vpop.f32.mrb[0].mxu0
    %v216 = vadd.f32 %v98, %v215
    %v217 = vpop.f32.mrb[0].mxu0
    %218 = vmatprep.mubr.f32.mxu0 0.0
    %219 = vmatmul.mubr.f32.gmra.mrb[0].mxu0 %v119
    %v220 = vpop.f32.mrb[0].mxu0
    %v221 = vadd.f32 %v98, %v220
    %v222 = vpop.f32.mrb[0].mxu0
    %223 = vmatprep.mubr.f32.mxu0 0.0
    %224 = vmatmul.mubr.f32.gmra.mrb[0].mxu0 %v122
    %v225 = vpop.f32.mrb[0].mxu0
    %v226 = vadd.f32 %v98, %v225
    %v227 = vpop.f32.mrb[0].mxu0
    %228 = vdwg.mxu0
    %v229 = vld [vmem:[%s1] sm:$0xff]
    %s230 = scalar_lea.vmem %s1, 8
    %v231 = vld [vmem:[%s230] sm:$0xff]
    %v233 = vsel %vm99, %v229, 0
    %235 = vmatprep.subr.mxu0 0.0
    %236 = vmatpush1.msra.mxu0 %v85
    %237 = vmatprep.subr.mxu0 0.0
    %238 = vmatpush1.msra.mxu0 %v86
    %239 = vmatprep.subr.mxu0 0.0
    %240 = vmatpush1.msra.mxu0 %v87
    %241 = vmatprep.subr.mxu0 0.0
    %242 = vmatpush1.msra.mxu0 %v88
    %243 = vmatprep.subr.mxu0 0.0
    %244 = vmatpush1.msra.mxu0 0.0
    %245 = vmatprep.subr.mxu0 0.0
    %246 = vmatpush1.msra.mxu0 0.0
    %247 = vmatprep.subr.mxu0 0.0
    %248 = vmatpush1.msra.mxu0 0.0
    %249 = vmatprep.subr.mxu0 0.0
    %250 = vmatpush1.msra.mxu0 0.0
    %251 = vmatprep.subr.mxu0 0.0
    %252 = vmatpush1.msra.mxu0 0.0
    %253 = vmatprep.subr.mxu0 0.0
    %254 = vmatpush1.msra.mxu0 0.0
    %255 = vmatprep.subr.mxu0 0.0
    %256 = vmatpush1.msra.mxu0 0.0
    %257 = vmatprep.subr.mxu0 0.0
    %258 = vmatpush1.msra.mxu0 0.0
    %259 = vmatprep.subr.mxu0 0.0
    %260 = vmatpush1.msra.mxu0 0.0
    %261 = vmatprep.subr.mxu0 0.0
    %262 = vmatpush1.msra.mxu0 0.0
    %263 = vmatprep.subr.mxu0 0.0
    %264 = vmatpush1.msra.mxu0 0.0
    %265 = vmatprep.subr.mxu0 0.0
    %266 = vmatpush1.msra.mxu0 0.0
    %267 = vmatprep.subr.mxu0 0.0
    %268 = vmatpush1.msra.mxu0 0.0
    %269 = vmatprep.subr.mxu0 0.0
    %270 = vmatpush1.msra.mxu0 0.0
    %271 = vmatprep.subr.mxu0 0.0
    %272 = vmatpush1.msra.mxu0 0.0
    %273 = vmatprep.subr.mxu0 0.0
    %274 = vmatpush1.msra.mxu0 0.0
    %275 = vmatprep.subr.mxu0 0.0
    %276 = vmatpush1.msra.mxu0 0.0
    %277 = vmatprep.subr.mxu0 0.0
    %278 = vmatpush1.msra.mxu0 0.0
    %279 = vmatprep.subr.mxu0 0.0
    %280 = vmatpush1.msra.mxu0 0.0
    %281 = vmatprep.subr.mxu0 0.0
    %282 = vmatpush1.msra.mxu0 0.0
    %283 = vmatprep.subr.mxu0 0.0
    %284 = vmatpush1.msra.mxu0 0.0
    %285 = vmatprep.subr.mxu0 0.0
    %286 = vmatpush1.msra.mxu0 0.0
    %287 = vmatprep.subr.mxu0 0.0
    %288 = vmatpush1.msra.mxu0 0.0
    %289 = vmatprep.subr.mxu0 0.0
    %290 = vmatpush1.msra.mxu0 0.0
    %291 = vmatprep.subr.mxu0 0.0
    %292 = vmatpush1.msra.mxu0 0.0
    %293 = vmatprep.subr.mxu0 0.0
    %294 = vmatpush1.msra.mxu0 0.0
    %295 = vmatprep.subr.mxu0 0.0
    %296 = vmatpush1.msra.mxu0 0.0
    %297 = vmatprep.subr.mxu0 0.0
    %298 = vmatpush1.msra.mxu0 0.0
    %299 = vmatprep.mubr.f32.mxu0 0.0
    %300 = vmatmul.mubr.f32.gmra.mrb[0].mxu0 %v233
    %v301 = vpop.f32.mrb[0].mxu0
    %v302 = vadd.f32 0.0, %v301
    %v303 = vpop.f32.mrb[0].mxu0
    %304 = vdwg.mxu0
    %v305 = vadd.f32 %v191, %v302
    %v306 = vxor.u32 %v305, 2147483648
    %v307 = vmul.f32 %v306, 1.442695
    %v308 = vpow.pop %v307
    %v309 = vadd.f32 %v308, 1.0
    %v310 = vrcp.pop %v309
    %v311 = vmul.f32 1.0, %v310
    %v312 = vtanh.pop %v305
    %314 = vrot.lane.b32.xlu0 %v231, 32
    %v315 = vpop.permute.xlu0 %314
    %v317 = vmul.f32 %v311, %v315
    %319 = vrot.lane.b32.xlu0 %v312, 32
    %v320 = vpop.permute.xlu0 %319
    %v322 = vmul.f32 %v311, %v320
    %324 = vrot.lane.b32.xlu0 %v322, 32
    %v325 = vpop.permute.xlu0 %324
    %v327 = vadd.f32 %v317, %v325
    %v328 = vtanh.pop %v327
    %330 = vrot.lane.b32.xlu0 %v328, 32
    %v331 = vpop.permute.xlu0 %330
    %v333 = vmul.f32 %v311, %v331
    %335 = vrot.lane.b32.xlu0 %v333, 64
    %v336 = vpop.permute.xlu0 %335
    %v337 = vsel %vm99, %v336, 0
    %339 = vmatprep.subr.mxu0 0.0
    %340 = vmatpush1.msra.mxu0 %v85
    %341 = vmatprep.subr.mxu0 0.0
    %342 = vmatpush1.msra.mxu0 %v86
    %343 = vmatprep.subr.mxu0 0.0
    %344 = vmatpush1.msra.mxu0 %v87
    %345 = vmatprep.subr.mxu0 0.0
    %346 = vmatpush1.msra.mxu0 %v88
    %347 = vmatprep.subr.mxu0 0.0
    %348 = vmatpush1.msra.mxu0 0.0
    %349 = vmatprep.subr.mxu0 0.0
    %350 = vmatpush1.msra.mxu0 0.0
    %351 = vmatprep.subr.mxu0 0.0
    %352 = vmatpush1.msra.mxu0 0.0
    %353 = vmatprep.subr.mxu0 0.0
    %354 = vmatpush1.msra.mxu0 0.0
    %355 = vmatprep.subr.mxu0 0.0
    %356 = vmatpush1.msra.mxu0 0.0
    %357 = vmatprep.subr.mxu0 0.0
    %358 = vmatpush1.msra.mxu0 0.0
    %359 = vmatprep.subr.mxu0 0.0
    %360 = vmatpush1.msra.mxu0 0.0
    %361 = vmatprep.subr.mxu0 0.0
    %362 = vmatpush1.msra.mxu0 0.0
    %363 = vmatprep.subr.mxu0 0.0
    %364 = vmatpush1.msra.mxu0 0.0
    %365 = vmatprep.subr.mxu0 0.0
    %366 = vmatpush1.msra.mxu0 0.0
    %367 = vmatprep.subr.mxu0 0.0
    %368 = vmatpush1.msra.mxu0 0.0
    %369 = vmatprep.subr.mxu0 0.0
    %370 = vmatpush1.msra.mxu0 0.0
    %371 = vmatprep.subr.mxu0 0.0
    %372 = vmatpush1.msra.mxu0 0.0
    %373 = vmatprep.subr.mxu0 0.0
    %374 = vmatpush1.msra.mxu0 0.0
    %375 = vmatprep.subr.mxu0 0.0
    %376 = vmatpush1.msra.mxu0 0.0
    %377 = vmatprep.subr.mxu0 0.0
    %378 = vmatpush1.msra.mxu0 0.0
    %379 = vmatprep.subr.mxu0 0.0
    %380 = vmatpush1.msra.mxu0 0.0
    %381 = vmatprep.subr.mxu0 0.0
    %382 = vmatpush1.msra.mxu0 0.0
    %383 = vmatprep.subr.mxu0 0.0
    %384 = vmatpush1.msra.mxu0 0.0
    %385 = vmatprep.subr.mxu0 0.0
    %386 = vmatpush1.msra.mxu0 0.0
    %387 = vmatprep.subr.mxu0 0.0
    %388 = vmatpush1.msra.mxu0 0.0
    %389 = vmatprep.subr.mxu0 0.0
    %390 = vmatpush1.msra.mxu0 0.0
    %391 = vmatprep.subr.mxu0 0.0
    %392 = vmatpush1.msra.mxu0 0.0
    %393 = vmatprep.subr.mxu0 0.0
    %394 = vmatpush1.msra.mxu0 0.0
    %395 = vmatprep.subr.mxu0 0.0
    %396 = vmatpush1.msra.mxu0 0.0
    %397 = vmatprep.subr.mxu0 0.0
    %398 = vmatpush1.msra.mxu0 0.0
    %399 = vmatprep.subr.mxu0 0.0
    %400 = vmatpush1.msra.mxu0 0.0
    %401 = vmatprep.subr.mxu0 0.0
    %402 = vmatpush1.msra.mxu0 0.0
    %403 = vmatprep.mubr.f32.mxu0 0.0
    %404 = vmatmul.mubr.f32.gmra.mrb[0].mxu0 %v337
    %v405 = vpop.f32.mrb[0].mxu0
    %v406 = vadd.f32 0.0, %v405
    %v407 = vpop.f32.mrb[0].mxu0
    %408 = vdwg.mxu0
    %v409 = vadd.f32 %v196, %v406
    %v410 = vxor.u32 %v409, 2147483648
    %v411 = vmul.f32 %v410, 1.442695
    %v412 = vpow.pop %v411
    %v413 = vadd.f32 %v412, 1.0
    %v414 = vrcp.pop %v413
    %v415 = vmul.f32 1.0, %v414
    %v416 = vtanh.pop %v409
    %v417 = vmul.f32 %v415, %v327
    %419 = vrot.lane.b32.xlu0 %v416, 32
    %v420 = vpop.permute.xlu0 %419
    %v422 = vmul.f32 %v415, %v420
    %424 = vrot.lane.b32.xlu0 %v422, 32
    %v425 = vpop.permute.xlu0 %424
    %v427 = vadd.f32 %v417, %v425
    %v428 = vtanh.pop %v427
    %430 = vrot.lane.b32.xlu0 %v428, 32
    %v431 = vpop.permute.xlu0 %430
    %v433 = vmul.f32 %v415, %v431
    %435 = vrot.lane.b32.xlu0 %v433, 64
    %v436 = vpop.permute.xlu0 %435
    %v437 = vsel %vm99, %v436, 0
    %439 = vmatprep.subr.mxu0 0.0
    %440 = vmatpush1.msra.mxu0 %v85
    %441 = vmatprep.subr.mxu0 0.0
    %442 = vmatpush1.msra.mxu0 %v86
    %443 = vmatprep.subr.mxu0 0.0
    %444 = vmatpush1.msra.mxu0 %v87
    %445 = vmatprep.subr.mxu0 0.0
    %446 = vmatpush1.msra.mxu0 %v88
    %447 = vmatprep.subr.mxu0 0.0
    %448 = vmatpush1.msra.mxu0 0.0
    %449 = vmatprep.subr.mxu0 0.0
    %450 = vmatpush1.msra.mxu0 0.0
    %451 = vmatprep.subr.mxu0 0.0
    %452 = vmatpush1.msra.mxu0 0.0
    %453 = vmatprep.subr.mxu0 0.0
    %454 = vmatpush1.msra.mxu0 0.0
    %455 = vmatprep.subr.mxu0 0.0
    %456 = vmatpush1.msra.mxu0 0.0
    %457 = vmatprep.subr.mxu0 0.0
    %458 = vmatpush1.msra.mxu0 0.0
    %459 = vmatprep.subr.mxu0 0.0
    %460 = vmatpush1.msra.mxu0 0.0
    %461 = vmatprep.subr.mxu0 0.0
    %462 = vmatpush1.msra.mxu0 0.0
    %463 = vmatprep.subr.mxu0 0.0
    %464 = vmatpush1.msra.mxu0 0.0
    %465 = vmatprep.subr.mxu0 0.0
    %466 = vmatpush1.msra.mxu0 0.0
    %467 = vmatprep.subr.mxu0 0.0
    %468 = vmatpush1.msra.mxu0 0.0
    %469 = vmatprep.subr.mxu0 0.0
    %470 = vmatpush1.msra.mxu0 0.0
    %471 = vmatprep.subr.mxu0 0.0
    %472 = vmatpush1.msra.mxu0 0.0
    %473 = vmatprep.subr.mxu0 0.0
    %474 = vmatpush1.msra.mxu0 0.0
    %475 = vmatprep.subr.mxu0 0.0
    %476 = vmatpush1.msra.mxu0 0.0
    %477 = vmatprep.subr.mxu0 0.0
    %478 = vmatpush1.msra.mxu0 0.0
    %479 = vmatprep.subr.mxu0 0.0
    %480 = vmatpush1.msra.mxu0 0.0
    %481 = vmatprep.subr.mxu0 0.0
    %482 = vmatpush1.msra.mxu0 0.0
    %483 = vmatprep.subr.mxu0 0.0
    %484 = vmatpush1.msra.mxu0 0.0
    %485 = vmatprep.subr.mxu0 0.0
    %486 = vmatpush1.msra.mxu0 0.0
    %487 = vmatprep.subr.mxu0 0.0
    %488 = vmatpush1.msra.mxu0 0.0
    %489 = vmatprep.subr.mxu0 0.0
    %490 = vmatpush1.msra.mxu0 0.0
    %491 = vmatprep.subr.mxu0 0.0
    %492 = vmatpush1.msra.mxu0 0.0
    %493 = vmatprep.subr.mxu0 0.0
    %494 = vmatpush1.msra.mxu0 0.0
    %495 = vmatprep.subr.mxu0 0.0
    %496 = vmatpush1.msra.mxu0 0.0
    %497 = vmatprep.subr.mxu0 0.0
    %498 = vmatpush1.msra.mxu0 0.0
    %499 = vmatprep.subr.mxu0 0.0
    %500 = vmatpush1.msra.mxu0 0.0
    %501 = vmatprep.subr.mxu0 0.0
    %502 = vmatpush1.msra.mxu0 0.0
    %503 = vmatprep.mubr.f32.mxu0 0.0
    %504 = vmatmul.mubr.f32.gmra.mrb[0].mxu0 %v437
    %v505 = vpop.f32.mrb[0].mxu0
    %v506 = vadd.f32 0.0, %v505
    %v507 = vpop.f32.mrb[0].mxu0
    %508 = vdwg.mxu0
    %v509 = vadd.f32 %v201, %v506
    %v510 = vxor.u32 %v509, 2147483648
    %v511 = vmul.f32 %v510, 1.442695
    %v512 = vpow.pop %v511
    %v513 = vadd.f32 %v512, 1.0
    %v514 = vrcp.pop %v513
    %v515 = vmul.f32 1.0, %v514
    %v516 = vtanh.pop %v509
    %v517 = vmul.f32 %v515, %v427
    %519 = vrot.lane.b32.xlu0 %v516, 32
    %v520 = vpop.permute.xlu0 %519
    %v522 = vmul.f32 %v515, %v520
    %524 = vrot.lane.b32.xlu0 %v522, 32
    %v525 = vpop.permute.xlu0 %524
    %v527 = vadd.f32 %v517, %v525
    %v528 = vtanh.pop %v527
    %530 = vrot.lane.b32.xlu0 %v528, 32
    %v531 = vpop.permute.xlu0 %530
    %v533 = vmul.f32 %v515, %v531
    %535 = vrot.lane.b32.xlu0 %v533, 64
    %v536 = vpop.permute.xlu0 %535
    %v537 = vsel %vm99, %v536, 0
    %539 = vmatprep.subr.mxu0 0.0
    %540 = vmatpush1.msra.mxu0 %v85
    %541 = vmatprep.subr.mxu0 0.0
    %542 = vmatpush1.msra.mxu0 %v86
    %543 = vmatprep.subr.mxu0 0.0
    %544 = vmatpush1.msra.mxu0 %v87
    %545 = vmatprep.subr.mxu0 0.0
    %546 = vmatpush1.msra.mxu0 %v88
    %547 = vmatprep.subr.mxu0 0.0
    %548 = vmatpush1.msra.mxu0 0.0
    %549 = vmatprep.subr.mxu0 0.0
    %550 = vmatpush1.msra.mxu0 0.0
    %551 = vmatprep.subr.mxu0 0.0
    %552 = vmatpush1.msra.mxu0 0.0
    %553 = vmatprep.subr.mxu0 0.0
    %554 = vmatpush1.msra.mxu0 0.0
    %555 = vmatprep.subr.mxu0 0.0
    %556 = vmatpush1.msra.mxu0 0.0
    %557 = vmatprep.subr.mxu0 0.0
    %558 = vmatpush1.msra.mxu0 0.0
    %559 = vmatprep.subr.mxu0 0.0
    %560 = vmatpush1.msra.mxu0 0.0
    %561 = vmatprep.subr.mxu0 0.0
    %562 = vmatpush1.msra.mxu0 0.0
    %563 = vmatprep.subr.mxu0 0.0
    %564 = vmatpush1.msra.mxu0 0.0
    %565 = vmatprep.subr.mxu0 0.0
    %566 = vmatpush1.msra.mxu0 0.0
    %567 = vmatprep.subr.mxu0 0.0
    %568 = vmatpush1.msra.mxu0 0.0
    %569 = vmatprep.subr.mxu0 0.0
    %570 = vmatpush1.msra.mxu0 0.0
    %571 = vmatprep.subr.mxu0 0.0
    %572 = vmatpush1.msra.mxu0 0.0
    %573 = vmatprep.subr.mxu0 0.0
    %574 = vmatpush1.msra.mxu0 0.0
    %575 = vmatprep.subr.mxu0 0.0
    %576 = vmatpush1.msra.mxu0 0.0
    %577 = vmatprep.subr.mxu0 0.0
    %578 = vmatpush1.msra.mxu0 0.0
    %579 = vmatprep.subr.mxu0 0.0
    %580 = vmatpush1.msra.mxu0 0.0
    %581 = vmatprep.subr.mxu0 0.0
    %582 = vmatpush1.msra.mxu0 0.0
    %583 = vmatprep.subr.mxu0 0.0
    %584 = vmatpush1.msra.mxu0 0.0
    %585 = vmatprep.subr.mxu0 0.0
    %586 = vmatpush1.msra.mxu0 0.0
    %587 = vmatprep.subr.mxu0 0.0
    %588 = vmatpush1.msra.mxu0 0.0
    %589 = vmatprep.subr.mxu0 0.0
    %590 = vmatpush1.msra.mxu0 0.0
    %591 = vmatprep.subr.mxu0 0.0
    %592 = vmatpush1.msra.mxu0 0.0
    %593 = vmatprep.subr.mxu0 0.0
    %594 = vmatpush1.msra.mxu0 0.0
    %595 = vmatprep.subr.mxu0 0.0
    %596 = vmatpush1.msra.mxu0 0.0
    %597 = vmatprep.subr.mxu0 0.0
    %598 = vmatpush1.msra.mxu0 0.0
    %599 = vmatprep.subr.mxu0 0.0
    %600 = vmatpush1.msra.mxu0 0.0
    %601 = vmatprep.subr.mxu0 0.0
    %602 = vmatpush1.msra.mxu0 0.0
    %603 = vmatprep.mubr.f32.mxu0 0.0
    %604 = vmatmul.mubr.f32.gmra.mrb[0].mxu0 %v537
    %v605 = vpop.f32.mrb[0].mxu0
    %v606 = vadd.f32 0.0, %v605
    %v607 = vpop.f32.mrb[0].mxu0
    %608 = vdwg.mxu0
    %v609 = vadd.f32 %v206, %v606
    %v610 = vxor.u32 %v609, 2147483648
    %v611 = vmul.f32 %v610, 1.442695
    %v612 = vpow.pop %v611
    %v613 = vadd.f32 %v612, 1.0
    %v614 = vrcp.pop %v613
    %v615 = vmul.f32 1.0, %v614
    %v616 = vtanh.pop %v609
    %v617 = vmul.f32 %v615, %v527
    %619 = vrot.lane.b32.xlu0 %v616, 32
    %v620 = vpop.permute.xlu0 %619
    %v622 = vmul.f32 %v615, %v620
    %624 = vrot.lane.b32.xlu0 %v622, 32
    %v625 = vpop.permute.xlu0 %624
    %v627 = vadd.f32 %v617, %v625
    %v628 = vtanh.pop %v627
    %630 = vrot.lane.b32.xlu0 %v628, 32
    %v631 = vpop.permute.xlu0 %630
    %v633 = vmul.f32 %v615, %v631
    %635 = vrot.lane.b32.xlu0 %v633, 64
    %v636 = vpop.permute.xlu0 %635
    %v637 = vsel %vm99, %v636, 0
    %639 = vmatprep.subr.mxu0 0.0
    %640 = vmatpush1.msra.mxu0 %v85
    %641 = vmatprep.subr.mxu0 0.0
    %642 = vmatpush1.msra.mxu0 %v86
    %643 = vmatprep.subr.mxu0 0.0
    %644 = vmatpush1.msra.mxu0 %v87
    %645 = vmatprep.subr.mxu0 0.0
    %646 = vmatpush1.msra.mxu0 %v88
    %647 = vmatprep.subr.mxu0 0.0
    %648 = vmatpush1.msra.mxu0 0.0
    %649 = vmatprep.subr.mxu0 0.0
    %650 = vmatpush1.msra.mxu0 0.0
    %651 = vmatprep.subr.mxu0 0.0
    %652 = vmatpush1.msra.mxu0 0.0
    %653 = vmatprep.subr.mxu0 0.0
    %654 = vmatpush1.msra.mxu0 0.0
    %655 = vmatprep.subr.mxu0 0.0
    %656 = vmatpush1.msra.mxu0 0.0
    %657 = vmatprep.subr.mxu0 0.0
    %658 = vmatpush1.msra.mxu0 0.0
    %659 = vmatprep.subr.mxu0 0.0
    %660 = vmatpush1.msra.mxu0 0.0
    %661 = vmatprep.subr.mxu0 0.0
    %662 = vmatpush1.msra.mxu0 0.0
    %663 = vmatprep.subr.mxu0 0.0
    %664 = vmatpush1.msra.mxu0 0.0
    %665 = vmatprep.subr.mxu0 0.0
    %666 = vmatpush1.msra.mxu0 0.0
    %667 = vmatprep.subr.mxu0 0.0
    %668 = vmatpush1.msra.mxu0 0.0
    %669 = vmatprep.subr.mxu0 0.0
    %670 = vmatpush1.msra.mxu0 0.0
    %671 = vmatprep.subr.mxu0 0.0
    %672 = vmatpush1.msra.mxu0 0.0
    %673 = vmatprep.subr.mxu0 0.0
    %674 = vmatpush1.msra.mxu0 0.0
    %675 = vmatprep.subr.mxu0 0.0
    %676 = vmatpush1.msra.mxu0 0.0
    %677 = vmatprep.subr.mxu0 0.0
    %678 = vmatpush1.msra.mxu0 0.0
    %679 = vmatprep.subr.mxu0 0.0
    %680 = vmatpush1.msra.mxu0 0.0
    %681 = vmatprep.subr.mxu0 0.0
    %682 = vmatpush1.msra.mxu0 0.0
    %683 = vmatprep.subr.mxu0 0.0
    %684 = vmatpush1.msra.mxu0 0.0
    %685 = vmatprep.subr.mxu0 0.0
    %686 = vmatpush1.msra.mxu0 0.0
    %687 = vmatprep.subr.mxu0 0.0
    %688 = vmatpush1.msra.mxu0 0.0
    %689 = vmatprep.subr.mxu0 0.0
    %690 = vmatpush1.msra.mxu0 0.0
    %691 = vmatprep.subr.mxu0 0.0
    %692 = vmatpush1.msra.mxu0 0.0
    %693 = vmatprep.subr.mxu0 0.0
    %694 = vmatpush1.msra.mxu0 0.0
    %695 = vmatprep.subr.mxu0 0.0
    %696 = vmatpush1.msra.mxu0 0.0
    %697 = vmatprep.subr.mxu0 0.0
    %698 = vmatpush1.msra.mxu0 0.0
    %699 = vmatprep.subr.mxu0 0.0
    %700 = vmatpush1.msra.mxu0 0.0
    %701 = vmatprep.subr.mxu0 0.0
    %702 = vmatpush1.msra.mxu0 0.0
    %703 = vmatprep.mubr.f32.mxu0 0.0
    %704 = vmatmul.mubr.f32.gmra.mrb[0].mxu0 %v637
    %v705 = vpop.f32.mrb[0].mxu0
    %v706 = vadd.f32 0.0, %v705
    %v707 = vpop.f32.mrb[0].mxu0
    %708 = vdwg.mxu0
    %v709 = vadd.f32 %v211, %v706
    %v710 = vxor.u32 %v709, 2147483648
    %v711 = vmul.f32 %v710, 1.442695
    %v712 = vpow.pop %v711
    %v713 = vadd.f32 %v712, 1.0
    %v714 = vrcp.pop %v713
    %v715 = vmul.f32 1.0, %v714
    %v716 = vtanh.pop %v709
    %v717 = vmul.f32 %v715, %v627
    %719 = vrot.lane.b32.xlu0 %v716, 32
    %v720 = vpop.permute.xlu0 %719
    %v722 = vmul.f32 %v715, %v720
    %724 = vrot.lane.b32.xlu0 %v722, 32
    %v725 = vpop.permute.xlu0 %724
    %v727 = vadd.f32 %v717, %v725
    %v728 = vtanh.pop %v727
    %730 = vrot.lane.b32.xlu0 %v728, 32
    %v731 = vpop.permute.xlu0 %730
    %v733 = vmul.f32 %v715, %v731
    %735 = vrot.lane.b32.xlu0 %v733, 64
    %v736 = vpop.permute.xlu0 %735
    %v737 = vsel %vm99, %v736, 0
    %739 = vmatprep.subr.mxu0 0.0
    %740 = vmatpush1.msra.mxu0 %v85
    %741 = vmatprep.subr.mxu0 0.0
    %742 = vmatpush1.msra.mxu0 %v86
    %743 = vmatprep.subr.mxu0 0.0
    %744 = vmatpush1.msra.mxu0 %v87
    %745 = vmatprep.subr.mxu0 0.0
    %746 = vmatpush1.msra.mxu0 %v88
    %747 = vmatprep.subr.mxu0 0.0
    %748 = vmatpush1.msra.mxu0 0.0
    %749 = vmatprep.subr.mxu0 0.0
    %750 = vmatpush1.msra.mxu0 0.0
    %751 = vmatprep.subr.mxu0 0.0
    %752 = vmatpush1.msra.mxu0 0.0
    %753 = vmatprep.subr.mxu0 0.0
    %754 = vmatpush1.msra.mxu0 0.0
    %755 = vmatprep.subr.mxu0 0.0
    %756 = vmatpush1.msra.mxu0 0.0
    %757 = vmatprep.subr.mxu0 0.0
    %758 = vmatpush1.msra.mxu0 0.0
    %759 = vmatprep.subr.mxu0 0.0
    %760 = vmatpush1.msra.mxu0 0.0
    %761 = vmatprep.subr.mxu0 0.0
    %762 = vmatpush1.msra.mxu0 0.0
    %763 = vmatprep.subr.mxu0 0.0
    %764 = vmatpush1.msra.mxu0 0.0
    %765 = vmatprep.subr.mxu0 0.0
    %766 = vmatpush1.msra.mxu0 0.0
    %767 = vmatprep.subr.mxu0 0.0
    %768 = vmatpush1.msra.mxu0 0.0
    %769 = vmatprep.subr.mxu0 0.0
    %770 = vmatpush1.msra.mxu0 0.0
    %771 = vmatprep.subr.mxu0 0.0
    %772 = vmatpush1.msra.mxu0 0.0
    %773 = vmatprep.subr.mxu0 0.0
    %774 = vmatpush1.msra.mxu0 0.0
    %775 = vmatprep.subr.mxu0 0.0
    %776 = vmatpush1.msra.mxu0 0.0
    %777 = vmatprep.subr.mxu0 0.0
    %778 = vmatpush1.msra.mxu0 0.0
    %779 = vmatprep.subr.mxu0 0.0
    %780 = vmatpush1.msra.mxu0 0.0
    %781 = vmatprep.subr.mxu0 0.0
    %782 = vmatpush1.msra.mxu0 0.0
    %783 = vmatprep.subr.mxu0 0.0
    %784 = vmatpush1.msra.mxu0 0.0
    %785 = vmatprep.subr.mxu0 0.0
    %786 = vmatpush1.msra.mxu0 0.0
    %787 = vmatprep.subr.mxu0 0.0
    %788 = vmatpush1.msra.mxu0 0.0
    %789 = vmatprep.subr.mxu0 0.0
    %790 = vmatpush1.msra.mxu0 0.0
    %791 = vmatprep.subr.mxu0 0.0
    %792 = vmatpush1.msra.mxu0 0.0
    %793 = vmatprep.subr.mxu0 0.0
    %794 = vmatpush1.msra.mxu0 0.0
    %795 = vmatprep.subr.mxu0 0.0
    %796 = vmatpush1.msra.mxu0 0.0
    %797 = vmatprep.subr.mxu0 0.0
    %798 = vmatpush1.msra.mxu0 0.0
    %799 = vmatprep.subr.mxu0 0.0
    %800 = vmatpush1.msra.mxu0 0.0
    %801 = vmatprep.subr.mxu0 0.0
    %802 = vmatpush1.msra.mxu0 0.0
    %803 = vmatprep.mubr.f32.mxu0 0.0
    %804 = vmatmul.mubr.f32.gmra.mrb[0].mxu0 %v737
    %v805 = vpop.f32.mrb[0].mxu0
    %v806 = vadd.f32 0.0, %v805
    %v807 = vpop.f32.mrb[0].mxu0
    %808 = vdwg.mxu0
    %v809 = vadd.f32 %v216, %v806
    %v810 = vxor.u32 %v809, 2147483648
    %v811 = vmul.f32 %v810, 1.442695
    %v812 = vpow.pop %v811
    %v813 = vadd.f32 %v812, 1.0
    %v814 = vrcp.pop %v813
    %v815 = vmul.f32 1.0, %v814
    %v816 = vtanh.pop %v809
    %v817 = vmul.f32 %v815, %v727
    %819 = vrot.lane.b32.xlu0 %v816, 32
    %v820 = vpop.permute.xlu0 %819
    %v822 = vmul.f32 %v815, %v820
    %824 = vrot.lane.b32.xlu0 %v822, 32
    %v825 = vpop.permute.xlu0 %824
    %v827 = vadd.f32 %v817, %v825
    %v828 = vtanh.pop %v827
    %830 = vrot.lane.b32.xlu0 %v828, 32
    %v831 = vpop.permute.xlu0 %830
    %v833 = vmul.f32 %v815, %v831
    %835 = vrot.lane.b32.xlu0 %v833, 64
    %v836 = vpop.permute.xlu0 %835
    %v837 = vsel %vm99, %v836, 0
    %839 = vmatprep.subr.mxu0 0.0
    %840 = vmatpush1.msra.mxu0 %v85
    %841 = vmatprep.subr.mxu0 0.0
    %842 = vmatpush1.msra.mxu0 %v86
    %843 = vmatprep.subr.mxu0 0.0
    %844 = vmatpush1.msra.mxu0 %v87
    %845 = vmatprep.subr.mxu0 0.0
    %846 = vmatpush1.msra.mxu0 %v88
    %847 = vmatprep.subr.mxu0 0.0
    %848 = vmatpush1.msra.mxu0 0.0
    %849 = vmatprep.subr.mxu0 0.0
    %850 = vmatpush1.msra.mxu0 0.0
    %851 = vmatprep.subr.mxu0 0.0
    %852 = vmatpush1.msra.mxu0 0.0
    %853 = vmatprep.subr.mxu0 0.0
    %854 = vmatpush1.msra.mxu0 0.0
    %855 = vmatprep.subr.mxu0 0.0
    %856 = vmatpush1.msra.mxu0 0.0
    %857 = vmatprep.subr.mxu0 0.0
    %858 = vmatpush1.msra.mxu0 0.0
    %859 = vmatprep.subr.mxu0 0.0
    %860 = vmatpush1.msra.mxu0 0.0
    %861 = vmatprep.subr.mxu0 0.0
    %862 = vmatpush1.msra.mxu0 0.0
    %863 = vmatprep.subr.mxu0 0.0
    %864 = vmatpush1.msra.mxu0 0.0
    %865 = vmatprep.subr.mxu0 0.0
    %866 = vmatpush1.msra.mxu0 0.0
    %867 = vmatprep.subr.mxu0 0.0
    %868 = vmatpush1.msra.mxu0 0.0
    %869 = vmatprep.subr.mxu0 0.0
    %870 = vmatpush1.msra.mxu0 0.0
    %871 = vmatprep.subr.mxu0 0.0
    %872 = vmatpush1.msra.mxu0 0.0
    %873 = vmatprep.subr.mxu0 0.0
    %874 = vmatpush1.msra.mxu0 0.0
    %875 = vmatprep.subr.mxu0 0.0
    %876 = vmatpush1.msra.mxu0 0.0
    %877 = vmatprep.subr.mxu0 0.0
    %878 = vmatpush1.msra.mxu0 0.0
    %879 = vmatprep.subr.mxu0 0.0
    %880 = vmatpush1.msra.mxu0 0.0
    %881 = vmatprep.subr.mxu0 0.0
    %882 = vmatpush1.msra.mxu0 0.0
    %883 = vmatprep.subr.mxu0 0.0
    %884 = vmatpush1.msra.mxu0 0.0
    %885 = vmatprep.subr.mxu0 0.0
    %886 = vmatpush1.msra.mxu0 0.0
    %887 = vmatprep.subr.mxu0 0.0
    %888 = vmatpush1.msra.mxu0 0.0
    %889 = vmatprep.subr.mxu0 0.0
    %890 = vmatpush1.msra.mxu0 0.0
    %891 = vmatprep.subr.mxu0 0.0
    %892 = vmatpush1.msra.mxu0 0.0
    %893 = vmatprep.subr.mxu0 0.0
    %894 = vmatpush1.msra.mxu0 0.0
    %895 = vmatprep.subr.mxu0 0.0
    %896 = vmatpush1.msra.mxu0 0.0
    %897 = vmatprep.subr.mxu0 0.0
    %898 = vmatpush1.msra.mxu0 0.0
    %899 = vmatprep.subr.mxu0 0.0
    %900 = vmatpush1.msra.mxu0 0.0
    %901 = vmatprep.subr.mxu0 0.0
    %902 = vmatpush1.msra.mxu0 0.0
    %903 = vmatprep.mubr.f32.mxu0 0.0
    %904 = vmatmul.mubr.f32.gmra.mrb[0].mxu0 %v837
    %v905 = vpop.f32.mrb[0].mxu0
    %v906 = vadd.f32 0.0, %v905
    %v907 = vpop.f32.mrb[0].mxu0
    %908 = vdwg.mxu0
    %v909 = vadd.f32 %v221, %v906
    %v910 = vxor.u32 %v909, 2147483648
    %v911 = vmul.f32 %v910, 1.442695
    %v912 = vpow.pop %v911
    %v913 = vadd.f32 %v912, 1.0
    %v914 = vrcp.pop %v913
    %v915 = vmul.f32 1.0, %v914
    %v916 = vtanh.pop %v909
    %v917 = vmul.f32 %v915, %v827
    %919 = vrot.lane.b32.xlu0 %v916, 32
    %v920 = vpop.permute.xlu0 %919
    %v922 = vmul.f32 %v915, %v920
    %924 = vrot.lane.b32.xlu0 %v922, 32
    %v925 = vpop.permute.xlu0 %924
    %v927 = vadd.f32 %v917, %v925
    %v928 = vtanh.pop %v927
    %930 = vrot.lane.b32.xlu0 %v928, 32
    %v931 = vpop.permute.xlu0 %930
    %v933 = vmul.f32 %v915, %v931
    %935 = vrot.lane.b32.xlu0 %v933, 64
    %v936 = vpop.permute.xlu0 %935
    %v937 = vsel %vm99, %v936, 0
    %939 = vmatprep.subr.mxu0 0.0
    %940 = vmatpush1.msra.mxu0 %v85
    %941 = vmatprep.subr.mxu0 0.0
    %942 = vmatpush1.msra.mxu0 %v86
    %943 = vmatprep.subr.mxu0 0.0
    %944 = vmatpush1.msra.mxu0 %v87
    %945 = vmatprep.subr.mxu0 0.0
    %946 = vmatpush1.msra.mxu0 %v88
    %947 = vmatprep.subr.mxu0 0.0
    %948 = vmatpush1.msra.mxu0 0.0
    %949 = vmatprep.subr.mxu0 0.0
    %950 = vmatpush1.msra.mxu0 0.0
    %951 = vmatprep.subr.mxu0 0.0
    %952 = vmatpush1.msra.mxu0 0.0
    %953 = vmatprep.subr.mxu0 0.0
    %954 = vmatpush1.msra.mxu0 0.0
    %955 = vmatprep.subr.mxu0 0.0
    %956 = vmatpush1.msra.mxu0 0.0
    %957 = vmatprep.subr.mxu0 0.0
    %958 = vmatpush1.msra.mxu0 0.0
    %959 = vmatprep.subr.mxu0 0.0
    %960 = vmatpush1.msra.mxu0 0.0
    %961 = vmatprep.subr.mxu0 0.0
    %962 = vmatpush1.msra.mxu0 0.0
    %963 = vmatprep.subr.mxu0 0.0
    %964 = vmatpush1.msra.mxu0 0.0
    %965 = vmatprep.subr.mxu0 0.0
    %966 = vmatpush1.msra.mxu0 0.0
    %967 = vmatprep.subr.mxu0 0.0
    %968 = vmatpush1.msra.mxu0 0.0
    %969 = vmatprep.subr.mxu0 0.0
    %970 = vmatpush1.msra.mxu0 0.0
    %971 = vmatprep.subr.mxu0 0.0
    %972 = vmatpush1.msra.mxu0 0.0
    %973 = vmatprep.subr.mxu0 0.0
    %974 = vmatpush1.msra.mxu0 0.0
    %975 = vmatprep.subr.mxu0 0.0
    %976 = vmatpush1.msra.mxu0 0.0
    %977 = vmatprep.subr.mxu0 0.0
    %978 = vmatpush1.msra.mxu0 0.0
    %979 = vmatprep.subr.mxu0 0.0
    %980 = vmatpush1.msra.mxu0 0.0
    %981 = vmatprep.subr.mxu0 0.0
    %982 = vmatpush1.msra.mxu0 0.0
    %983 = vmatprep.subr.mxu0 0.0
    %984 = vmatpush1.msra.mxu0 0.0
    %985 = vmatprep.subr.mxu0 0.0
    %986 = vmatpush1.msra.mxu0 0.0
    %987 = vmatprep.subr.mxu0 0.0
    %988 = vmatpush1.msra.mxu0 0.0
    %989 = vmatprep.subr.mxu0 0.0
    %990 = vmatpush1.msra.mxu0 0.0
    %991 = vmatprep.subr.mxu0 0.0
    %992 = vmatpush1.msra.mxu0 0.0
    %993 = vmatprep.subr.mxu0 0.0
    %994 = vmatpush1.msra.mxu0 0.0
    %995 = vmatprep.subr.mxu0 0.0
    %996 = vmatpush1.msra.mxu0 0.0
    %997 = vmatprep.subr.mxu0 0.0
    %998 = vmatpush1.msra.mxu0 0.0
    %999 = vmatprep.subr.mxu0 0.0
    %1000 = vmatpush1.msra.mxu0 0.0
    %1001 = vmatprep.subr.mxu0 0.0
    %1002 = vmatpush1.msra.mxu0 0.0
    %1003 = vmatprep.mubr.f32.mxu0 0.0
    %1004 = vmatmul.mubr.f32.gmra.mrb[0].mxu0 %v937
    %v1005 = vpop.f32.mrb[0].mxu0
    %v1006 = vadd.f32 0.0, %v1005
    %v1007 = vpop.f32.mrb[0].mxu0
    %1008 = vdwg.mxu0
    %v1009 = vadd.f32 %v226, %v1006
    %v1010 = vxor.u32 %v1009, 2147483648
    %v1011 = vmul.f32 %v1010, 1.442695
    %v1012 = vpow.pop %v1011
    %v1013 = vadd.f32 %v1012, 1.0
    %v1014 = vrcp.pop %v1013
    %v1015 = vmul.f32 1.0, %v1014
    %v1016 = vtanh.pop %v1009
    %v1017 = vmul.f32 %v1015, %v927
    %1019 = vrot.lane.b32.xlu0 %v1016, 32
    %v1020 = vpop.permute.xlu0 %1019
    %v1022 = vmul.f32 %v1015, %v1020
    %1024 = vrot.lane.b32.xlu0 %v1022, 32
    %v1025 = vpop.permute.xlu0 %1024
    %v1027 = vadd.f32 %v1017, %v1025
    %v1028 = vtanh.pop %v1027
    %1030 = vrot.lane.b32.xlu0 %v1028, 32
    %v1031 = vpop.permute.xlu0 %1030
    %v1033 = vmul.f32 %v1015, %v1031
    %v1034 = vlaneseq
    %v1035 = vshrl.u32 %v1034, 7
    %v1036 = vsub.s32 0, %v1035
    %v1037 = vrot.slane %v94, %v1036
    %1039 = vrot.lane.b32.xlu0 %v1033, 64
    %v1040 = vpop.permute.xlu0 %1039
    %v1041 = vsel %vm99, %v1040, 0
    %1043 = vmatprep.subr.mxu0 0.0
    %1044 = vmatpush1.msra.mxu0 %v90
    %1045 = vmatprep.subr.mxu0 0.0
    %1046 = vmatpush1.msra.mxu0 %v91
    %1047 = vmatprep.subr.mxu0 0.0
    %1048 = vmatpush1.msra.mxu0 %v92
    %1049 = vmatprep.subr.mxu0 0.0
    %1050 = vmatpush1.msra.mxu0 %v93
    %1051 = vmatprep.subr.mxu0 0.0
    %1052 = vmatpush1.msra.mxu0 0.0
    %1053 = vmatprep.subr.mxu0 0.0
    %1054 = vmatpush1.msra.mxu0 0.0
    %1055 = vmatprep.subr.mxu0 0.0
    %1056 = vmatpush1.msra.mxu0 0.0
    %1057 = vmatprep.subr.mxu0 0.0
    %1058 = vmatpush1.msra.mxu0 0.0
    %1059 = vmatprep.subr.mxu0 0.0
    %1060 = vmatpush1.msra.mxu0 0.0
    %1061 = vmatprep.subr.mxu0 0.0
    %1062 = vmatpush1.msra.mxu0 0.0
    %1063 = vmatprep.subr.mxu0 0.0
    %1064 = vmatpush1.msra.mxu0 0.0
    %1065 = vmatprep.subr.mxu0 0.0
    %1066 = vmatpush1.msra.mxu0 0.0
    %1067 = vmatprep.subr.mxu0 0.0
    %1068 = vmatpush1.msra.mxu0 0.0
    %1069 = vmatprep.subr.mxu0 0.0
    %1070 = vmatpush1.msra.mxu0 0.0
    %1071 = vmatprep.subr.mxu0 0.0
    %1072 = vmatpush1.msra.mxu0 0.0
    %1073 = vmatprep.subr.mxu0 0.0
    %1074 = vmatpush1.msra.mxu0 0.0
    %1075 = vmatprep.subr.mxu0 0.0
    %1076 = vmatpush1.msra.mxu0 0.0
    %1077 = vmatprep.subr.mxu0 0.0
    %1078 = vmatpush1.msra.mxu0 0.0
    %1079 = vmatprep.subr.mxu0 0.0
    %1080 = vmatpush1.msra.mxu0 0.0
    %1081 = vmatprep.subr.mxu0 0.0
    %1082 = vmatpush1.msra.mxu0 0.0
    %1083 = vmatprep.subr.mxu0 0.0
    %1084 = vmatpush1.msra.mxu0 0.0
    %1085 = vmatprep.subr.mxu0 0.0
    %1086 = vmatpush1.msra.mxu0 0.0
    %1087 = vmatprep.subr.mxu0 0.0
    %1088 = vmatpush1.msra.mxu0 0.0
    %1089 = vmatprep.subr.mxu0 0.0
    %1090 = vmatpush1.msra.mxu0 0.0
    %1091 = vmatprep.subr.mxu0 0.0
    %1092 = vmatpush1.msra.mxu0 0.0
    %1093 = vmatprep.subr.mxu0 0.0
    %1094 = vmatpush1.msra.mxu0 0.0
    %1095 = vmatprep.subr.mxu0 0.0
    %1096 = vmatpush1.msra.mxu0 0.0
    %1097 = vmatprep.subr.mxu0 0.0
    %1098 = vmatpush1.msra.mxu0 0.0
    %1099 = vmatprep.subr.mxu0 0.0
    %1100 = vmatpush1.msra.mxu0 0.0
    %1101 = vmatprep.subr.mxu0 0.0
    %1102 = vmatpush1.msra.mxu0 0.0
    %1103 = vmatprep.subr.mxu0 0.0
    %1104 = vmatpush1.msra.mxu0 0.0
    %1105 = vmatprep.subr.mxu0 0.0
    %1106 = vmatpush1.msra.mxu0 0.0
    %1107 = vmatprep.mubr.f32.mxu0 0.0
    %1108 = vmatmul.mubr.f32.gmra.mrb[0].mxu0 %v337
    %v1109 = vpop.f32.mrb[0].mxu0
    %v1110 = vadd.f32 %v1037, %v1109
    %v1111 = vpop.f32.mrb[0].mxu0
    %1112 = vmatprep.mubr.f32.mxu0 0.0
    %1113 = vmatmul.mubr.f32.gmra.mrb[0].mxu0 %v437
    %v1114 = vpop.f32.mrb[0].mxu0
    %v1115 = vadd.f32 %v1037, %v1114
    %v1116 = vpop.f32.mrb[0].mxu0
    %1117 = vmatprep.mubr.f32.mxu0 0.0
    %1118 = vmatmul.mubr.f32.gmra.mrb[0].mxu0 %v537
    %v1119 = vpop.f32.mrb[0].mxu0
    %v1120 = vadd.f32 %v1037, %v1119
    %v1121 = vpop.f32.mrb[0].mxu0
    %1122 = vmatprep.mubr.f32.mxu0 0.0
    %1123 = vmatmul.mubr.f32.gmra.mrb[0].mxu0 %v637
    %v1124 = vpop.f32.mrb[0].mxu0
    %v1125 = vadd.f32 %v1037, %v1124
    %v1126 = vpop.f32.mrb[0].mxu0
    %1127 = vmatprep.mubr.f32.mxu0 0.0
    %1128 = vmatmul.mubr.f32.gmra.mrb[0].mxu0 %v737
    %v1129 = vpop.f32.mrb[0].mxu0
    %v1130 = vadd.f32 %v1037, %v1129
    %v1131 = vpop.f32.mrb[0].mxu0
    %1132 = vmatprep.mubr.f32.mxu0 0.0
    %1133 = vmatmul.mubr.f32.gmra.mrb[0].mxu0 %v837
    %v1134 = vpop.f32.mrb[0].mxu0
    %v1135 = vadd.f32 %v1037, %v1134
    %v1136 = vpop.f32.mrb[0].mxu0
    %1137 = vmatprep.mubr.f32.mxu0 0.0
    %1138 = vmatmul.mubr.f32.gmra.mrb[0].mxu0 %v937
    %v1139 = vpop.f32.mrb[0].mxu0
    %v1140 = vadd.f32 %v1037, %v1139
    %v1141 = vpop.f32.mrb[0].mxu0
    %1142 = vmatprep.mubr.f32.mxu0 0.0
    %1143 = vmatmul.mubr.f32.gmra.mrb[0].mxu0 %v1041
    %v1144 = vpop.f32.mrb[0].mxu0
    %v1145 = vadd.f32 %v1037, %v1144
    %v1146 = vpop.f32.mrb[0].mxu0
    %1147 = vdwg.mxu0
    %v1148 = vtanh.pop %v1110
    %v1149 = vtanh.pop %v1115
    %v1150 = vtanh.pop %v1120
    %v1151 = vtanh.pop %v1125
    %v1152 = vtanh.pop %v1130
    %v1153 = vtanh.pop %v1135
    %v1154 = vtanh.pop %v1140
    %v1155 = vtanh.pop %v1145
    %1156 = vst [vmem:[#allocation2] sm:$0xff] %v1148
    %1157 = vst [vmem:[#allocation2 + $0x8] sm:$0xff] %v1149
    %1158 = vst [vmem:[#allocation2 + $0x10] sm:$0xff] %v1150
    %1159 = vst [vmem:[#allocation2 + $0x18] sm:$0xff] %v1151
    %1160 = vst [vmem:[#allocation2 + $0x20] sm:$0xff] %v1152
    %1161 = vst [vmem:[#allocation2 + $0x28] sm:$0xff] %v1153
    %1162 = vst [vmem:[#allocation2 + $0x30] sm:$0xff] %v1154
    %1163 = vst [vmem:[#allocation2 + $0x38] sm:$0xff] %v1155
    %1165 = vst.msk [vmem:[#allocation2 + $0x40] sm:$0xff] %vm99, %v1040
    %vm1166 = vcmask 523520
    %1167 = vst.msk [vmem:[#allocation2 + $0x40] sm:$0xff] %vm1166, %v1027
    // Predicated region
    $region14: #{tpu_custom_call.1} parent=1 // pred_check
      _
    $region15: #{tpu_custom_call.1} parent=1 // pred_check_branch
      %1169 = sbr.rel (0) target = $region17
    $region16: #{tpu_custom_call.1} parent=1 // pred_region
      %s1171 = ssub.s32 1152, 1152
      %1172 = vsyncadd [#allocation3], %s1171
      %s1173 = sshll.u32 [#allocation2], 4
      %s1174 = int_to_ptr.vmem [resolvable:$true] %s1173
      %1179 = dma.vmem_to_hbm [thread:$0]  %s1174, 1152, %s3, [#allocation3], 128, 128, 8
    $region17: #{tpu_custom_call.1} parent=1 // pred_fallthru
      _
    // Predicated region
    $region18: #{tpu_custom_call.1} parent=1 // pred_check
      _
    $region19: #{tpu_custom_call.1} parent=1 // pred_check_branch
      %1181 = sbr.rel (0) target = $region21
    $region20: #{tpu_custom_call.1} parent=1 // pred_region
      %1182 = dma.done [#allocation3], 1152
    $region21: #{tpu_custom_call.1} parent=1 // pred_fallthru
      _
    %1183 = vsyncpa [#allocation3], 1

</llo_original>
